<compile_context>
chip_gen: v7x
topology: tpu7x:2x2x1
jax: 0.10.0
libtpu: 0.0.40
codegen_flags: <defaults>
</compile_context>

<pallas_src>
import functools

import jax
import jax.numpy as jnp
from jax.experimental import pallas as pl
from jax.experimental.pallas import tpu as pltpu


def conv_bn_relu_kernel(x_ref, w_ref, gb_ref, o_ref):
    # x_ref:  (C_in, P)          f32   pixels along lanes
    # w_ref:  (C_out_blk, C_in)  bf16  pre-cast at init time
    # gb_ref: (C_out_blk, 2)     f32   column 0 = gamma, column 1 = beta
    # o_ref:  (C_out_blk, P)     f32
    # 1x1 conv == matmul on the MXU; cast activations to bf16 in-kernel,
    # accumulate in f32.
    x_bf = x_ref[...].astype(jnp.bfloat16)
    y = jnp.dot(w_ref[...], x_bf,
                preferred_element_type=jnp.float32)        # (C_out_blk, P) f32

    p = y.shape[1]
    inv_p = 1.0 / p

    # Batch statistics over the pixel axis (per-channel, so exact under the
    # C_out grid split). Two-pass variance for numerical fidelity.
    mean = jnp.sum(y, axis=1, keepdims=True) * inv_p       # (C_out_blk, 1)
    centered = y - mean
    var = jnp.sum(centered * centered, axis=1, keepdims=True) * inv_p

    eps = 1e-3
    inv_std = jax.lax.rsqrt(var + eps)                     # EUP, effectively free

    gamma = gb_ref[:, 0:1]                                 # (C_out_blk, 1)
    beta = gb_ref[:, 1:2]                                  # (C_out_blk, 1)
    scale = gamma * inv_std

    o_ref[...] = jnp.maximum(centered * scale + beta, 0.0).astype(o_ref.dtype)


def prepare_params(w_oihw, gamma, beta):
    """One-time (init-time) parameter preparation, outside the jitted forward."""
    c_out, c_in = w_oihw.shape[0], w_oihw.shape[1]
    w_mat = w_oihw.reshape(c_out, c_in).astype(jnp.bfloat16)      # (C_out, C_in) bf16
    gb = jnp.stack([gamma.astype(jnp.float32),
                    beta.astype(jnp.float32)], axis=-1)           # (C_out, 2) f32
    return w_mat, gb


def _num_cout_splits(c_out):
    """2 on multi-TensorCore chips (v7x / v4 / v5p), 1 on v5e / v6e."""
    try:
        kind = jax.devices()[0].device_kind.lower()
    except Exception:
        return 1
    multi_tc = ("v7" in kind) or ("v4" in kind) or ("v5p" in kind)
    if multi_tc and c_out % 16 == 0:
        return 2
    return 1


@functools.partial(jax.jit, static_argnames=("out_dtype",))
def conv_bn_relu(x_nchw, w_mat, gb, out_dtype=jnp.float32):
    """x_nchw: (N, C_in, H, W) f32; w_mat: (C_out, C_in) bf16; gb: (C_out, 2) f32."""
    n, c_in, h, wdt = x_nchw.shape
    c_out = w_mat.shape[0]
    p = n * h * wdt

    # Channels-major flattening. For N == 1 this is a pure reshape (no copy).
    if n == 1:
        x_cm = x_nchw.reshape(c_in, p)
    else:
        x_cm = jnp.transpose(x_nchw, (1, 0, 2, 3)).reshape(c_in, p)

    splits = _num_cout_splits(c_out)
    blk = c_out // splits

    out_cm = pl.pallas_call(
        conv_bn_relu_kernel,
        out_shape=jax.ShapeDtypeStruct((c_out, p), out_dtype),
        grid=(splits,),
        in_specs=[
            pl.BlockSpec((c_in, p), lambda i: (0, 0)),      # full activations
            pl.BlockSpec((blk, c_in), lambda i: (i, 0)),    # C_out slab of W
            pl.BlockSpec((blk, 2), lambda i: (i, 0)),       # gamma/beta slab
        ],
        out_specs=pl.BlockSpec((blk, p), lambda i: (i, 0)),
        compiler_params=pltpu.CompilerParams(
            dimension_semantics=("parallel",)),
    )(x_cm, w_mat, gb)

    # Back to NCHW (pure reshape when N == 1).
    if n == 1:
        return out_cm.reshape(1, c_out, h, wdt)
    return out_cm.reshape(c_out, n, h, wdt).transpose(1, 0, 2, 3)


def _reference(x_nchw, w_mat, gamma, beta):
    """Pure-JAX reference using the same bf16 matmul inputs / f32 BN math."""
    n, c_in, h, wdt = x_nchw.shape
    c_out = w_mat.shape[0]
    p = n * h * wdt
    x_cm = x_nchw.reshape(c_in, p).astype(jnp.bfloat16)
    y = jnp.dot(w_mat, x_cm, preferred_element_type=jnp.float32)
    mean = jnp.mean(y, axis=1, keepdims=True)
    var = jnp.mean((y - mean) ** 2, axis=1, keepdims=True)
    y_n = (y - mean) * jax.lax.rsqrt(var + 1e-3)
    out = jnp.maximum(y_n * gamma[:, None] + beta[:, None], 0.0)
    return out.reshape(1, c_out, h, wdt)


if __name__ == "__main__":
    key = jax.random.PRNGKey(0)
    k_x, k_w = jax.random.split(key)

    N, C_IN, H, W = 1, 768, 12, 12
    C_OUT = 192

    x = jax.random.normal(k_x, (N, C_IN, H, W), dtype=jnp.float32)

    # Conv2d weight (C_out, C_in, 1, 1), deterministic init (kaiming-like scale).
    fan_in = C_IN
    w = jax.random.normal(k_w, (C_OUT, C_IN, 1, 1), dtype=jnp.float32) * (fan_in ** -0.5)

    # BatchNorm2d default affine init: weight=1, bias=0.
    gamma = jnp.ones((C_OUT,), dtype=jnp.float32)
    beta = jnp.zeros((C_OUT,), dtype=jnp.float32)

    # One-time parameter preparation (outside the per-call forward).
    w_mat, gb = prepare_params(w, gamma, beta)

    out = conv_bn_relu(x, w_mat, gb)
    jax.block_until_ready(out)

    assert out.shape == (N, C_OUT, H, W)
    assert out.dtype == jnp.float32
    assert bool(jnp.all(out >= 0.0))

    ref = _reference(x, w_mat, gamma, beta)
    assert bool(jnp.allclose(out, ref, atol=2e-2, rtol=2e-2))

    print("KERNEL_OK")
</pallas_src>

<mosaic_0001>
module attributes {stable_mosaic.version = 11 : i64} {
  func.func @conv_bn_relu_kernel(%arg0: i32, %arg1: memref<768x144xf32, #tpu.memory_space<vmem>>, %arg2: memref<192x768xbf16, #tpu.memory_space<vmem>>, %arg3: memref<192x2xf32, #tpu.memory_space<vmem>>, %arg4: memref<192x144xf32, #tpu.memory_space<vmem>>) attributes {dimension_semantics = [#tpu.dimension_semantics<parallel>], iteration_bounds = array<i64: 1>, scalar_prefetch = 0 : i64, scratch_operands = 0 : i64, tpu.core_type = #tpu.core_type<tc>, window_params = [{pipeline_mode = #tpu.pipeline_mode<synchronous>, transform_indices = @transform_0, window_bounds = array<i64: 768, 144>}, {transform_indices = @transform_1, window_bounds = array<i64: 192, 768>}, {transform_indices = @transform_2, window_bounds = array<i64: 192, 2>}, {transform_indices = @transform_3, window_bounds = array<i64: 192, 144>}]} {
    %c0 = arith.constant 0 : index
    %c0_0 = arith.constant 0 : index
    %0 = vector.load %arg1[%c0, %c0_0] : memref<768x144xf32, #tpu.memory_space<vmem>>, vector<768x144xf32>
    %1 = arith.truncf %0 : vector<768x144xf32> to vector<768x144xbf16>
    %c0_1 = arith.constant 0 : index
    %c0_2 = arith.constant 0 : index
    %2 = vector.load %arg2[%c0_1, %c0_2] : memref<192x768xbf16, #tpu.memory_space<vmem>>, vector<192x768xbf16>
    %cst = arith.constant dense<0.000000e+00> : vector<192x144xf32>
    %3 = tpu.matmul %2, %1, %cst {dimension_numbers = #tpu.dot_dimension_numbers<[1], [0], [0], [1], [0, 0, 1, 1], [], []>} : vector<192x768xbf16>, vector<768x144xbf16>, vector<192x144xf32> -> vector<192x144xf32>
    %cst_3 = arith.constant dense<0.000000e+00> : vector<192xf32>
    %4 = vector.multi_reduction <add>, %3, %cst_3 [1] : vector<192x144xf32> to vector<192xf32>
    %5 = vector.shape_cast %4 : vector<192xf32> to vector<192x1xf32>
    %cst_4 = arith.constant 0.0069444445 : f32
    %6 = vector.broadcast %cst_4 : f32 to vector<192x1xf32>
    %7 = arith.mulf %5, %6 : vector<192x1xf32>
    %8 = vector.broadcast %7 : vector<192x1xf32> to vector<192x144xf32>
    %9 = arith.subf %3, %8 : vector<192x144xf32>
    %10 = arith.mulf %9, %9 : vector<192x144xf32>
    %cst_5 = arith.constant dense<0.000000e+00> : vector<192xf32>
    %11 = vector.multi_reduction <add>, %10, %cst_5 [1] : vector<192x144xf32> to vector<192xf32>
    %12 = vector.shape_cast %11 : vector<192xf32> to vector<192x1xf32>
    %cst_6 = arith.constant 0.0069444445 : f32
    %13 = vector.broadcast %cst_6 : f32 to vector<192x1xf32>
    %14 = arith.mulf %12, %13 : vector<192x1xf32>
    %cst_7 = arith.constant 1.000000e-03 : f32
    %15 = vector.broadcast %cst_7 : f32 to vector<192x1xf32>
    %16 = arith.addf %14, %15 : vector<192x1xf32>
    %17 = math.rsqrt %16 : vector<192x1xf32>
    %c0_8 = arith.constant 0 : index
    %c0_9 = arith.constant 0 : index
    %18 = vector.load %arg3[%c0_8, %c0_9] : memref<192x2xf32, #tpu.memory_space<vmem>>, vector<192x1xf32>
    %c0_10 = arith.constant 0 : index
    %c1 = arith.constant 1 : index
    %19 = vector.load %arg3[%c0_10, %c1] : memref<192x2xf32, #tpu.memory_space<vmem>>, vector<192x1xf32>
    %20 = arith.mulf %18, %17 : vector<192x1xf32>
    %21 = vector.broadcast %20 : vector<192x1xf32> to vector<192x144xf32>
    %22 = arith.mulf %9, %21 : vector<192x144xf32>
    %23 = vector.broadcast %19 : vector<192x1xf32> to vector<192x144xf32>
    %24 = arith.addf %22, %23 : vector<192x144xf32>
    %cst_11 = arith.constant 0.000000e+00 : f32
    %25 = vector.broadcast %cst_11 : f32 to vector<192x144xf32>
    %26 = arith.maximumf %24, %25 : vector<192x144xf32>
    %c0_12 = arith.constant 0 : index
    %c0_13 = arith.constant 0 : index
    %27 = vector.load %arg4[%c0_12, %c0_13] : memref<192x144xf32, #tpu.memory_space<vmem>>, vector<192x144xf32>
    tpu.vector_store %arg4[%c0_12, %c0_13], %26 {strides = array<i32>} : memref<192x144xf32, #tpu.memory_space<vmem>>, vector<192x144xf32>,
    return
  }
  func.func @transform_0(%arg0: i32) -> (i32, i32) {
    %c0_i32 = arith.constant 0 : i32
    %c0_i32_0 = arith.constant 0 : i32
    %c0_i32_1 = arith.constant 0 : i32
    return %c0_i32, %c0_i32_0 : i32, i32
  }
  func.func @transform_1(%arg0: i32) -> (i32, i32) {
    %c0_i32 = arith.constant 0 : i32
    %c0_i32_0 = arith.constant 0 : i32
    return %arg0, %c0_i32 : i32, i32
  }
  func.func @transform_2(%arg0: i32) -> (i32, i32) {
    %c0_i32 = arith.constant 0 : i32
    %c0_i32_0 = arith.constant 0 : i32
    return %arg0, %c0_i32 : i32, i32
  }
  func.func @transform_3(%arg0: i32) -> (i32, i32) {
    %c0_i32 = arith.constant 0 : i32
    %c0_i32_0 = arith.constant 0 : i32
    return %arg0, %c0_i32 : i32, i32
  }
}

</mosaic_0001>

<llo_original>
// kernel: conv_bn_relu.1
$region0: #{conv_bn_relu.1}
  #allocation0 [shape = 'u32[]', space=smem, size = 0x4, offset = 0x4, fixed_abs, tag = 'smem constant byte address 0x4 - core index']
  #allocation1 [shape = 'u32[144,128]{1,0:T(1,128)}', space=vmem, size = 0x12000, scoped, tag = 'internal scratch']
  %s0 = inlined_call_operand.vmem [shape: f32[768,144], index: 0, kind: input, shape index: {}]
  %s1 = inlined_call_operand.vmem [shape: bf16[192,768], index: 1, kind: input, shape index: {}]
  %s2 = inlined_call_operand.vmem [shape: f32[192,2], index: 2, kind: input, shape index: {}]
  %s3 = inlined_call_operand.vmem [shape: f32[192,144], index: 3, kind: output, shape index: {}]
  %s4 = sld [smem:[#allocation0]]
  $region22: #{conv_bn_relu.1} parent=0
    _
  %s6 = ssub.s32 1, %s4
  %s7 = scalar_select 0, %s6, %s4
  // Predicated region
  $region2: #{conv_bn_relu.1} parent=0 // pred_check
    _
  $region3: #{conv_bn_relu.1} parent=0 // pred_check_branch
    %9 = sbr.rel (0) target = $region5
  $region4: #{conv_bn_relu.1} parent=0 // pred_region
    _
  $region5: #{conv_bn_relu.1} parent=0 // pred_fallthru
    _
  // Predicated region
  $region6: #{conv_bn_relu.1} parent=0 // pred_check
    _
  $region7: #{conv_bn_relu.1} parent=0 // pred_check_branch
    %11 = sbr.rel (0) target = $region9
  $region8: #{conv_bn_relu.1} parent=0 // pred_region
    _
  $region9: #{conv_bn_relu.1} parent=0 // pred_fallthru
    _
  // Predicated region
  $region10: #{conv_bn_relu.1} parent=0 // pred_check
    _
  $region11: #{conv_bn_relu.1} parent=0 // pred_check_branch
    %13 = sbr.rel (0) target = $region13
  $region12: #{conv_bn_relu.1} parent=0 // pred_region
    _
  $region13: #{conv_bn_relu.1} parent=0 // pred_fallthru
    _
  %v14 = vld [vmem:[%s0] sm:$0xff]
  %v15 = vld [vmem:[%s0 + $0x8] sm:$0xff]
  %v16 = vld [vmem:[%s0 + $0x10] sm:$0xff]
  %v17 = vld [vmem:[%s0 + $0x18] sm:$0xff]
  %v18 = vld [vmem:[%s0 + $0x20] sm:$0xff]
  %v19 = vld [vmem:[%s0 + $0x28] sm:$0xff]
  %v20 = vld [vmem:[%s0 + $0x30] sm:$0xff]
  %v21 = vld [vmem:[%s0 + $0x38] sm:$0xff]
  %v22 = vld [vmem:[%s0 + $0x40] sm:$0xff]
  %v23 = vld [vmem:[%s0 + $0x48] sm:$0xff]
  %v24 = vld [vmem:[%s0 + $0x50] sm:$0xff]
  %v25 = vld [vmem:[%s0 + $0x58] sm:$0xff]
  %v26 = vld [vmem:[%s0 + $0x60] sm:$0xff]
  %v27 = vld [vmem:[%s0 + $0x68] sm:$0xff]
  %v28 = vld [vmem:[%s0 + $0x70] sm:$0xff]
  %v29 = vld [vmem:[%s0 + $0x78] sm:$0xff]
  %v30 = vld [vmem:[%s0 + $0x80] sm:$0xff]
  %v31 = vld [vmem:[%s0 + $0x88] sm:$0xff]
  %v32 = vld [vmem:[%s0 + $0x90] sm:$0xff]
  %v33 = vld [vmem:[%s0 + $0x98] sm:$0xff]
  %v34 = vld [vmem:[%s0 + $0xa0] sm:$0xff]
  %v35 = vld [vmem:[%s0 + $0xa8] sm:$0xff]
  %v36 = vld [vmem:[%s0 + $0xb0] sm:$0xff]
  %v37 = vld [vmem:[%s0 + $0xb8] sm:$0xff]
  %v38 = vld [vmem:[%s0 + $0xc0] sm:$0xff]
  %v39 = vld [vmem:[%s0 + $0xc8] sm:$0xff]
  %v40 = vld [vmem:[%s0 + $0xd0] sm:$0xff]
  %v41 = vld [vmem:[%s0 + $0xd8] sm:$0xff]
  %v42 = vld [vmem:[%s0 + $0xe0] sm:$0xff]
  %v43 = vld [vmem:[%s0 + $0xe8] sm:$0xff]
  %v44 = vld [vmem:[%s0 + $0xf0] sm:$0xff]
  %v45 = vld [vmem:[%s0 + $0xf8] sm:$0xff]
  %v46 = vld [vmem:[%s0 + $0x100] sm:$0xff]
  %v47 = vld [vmem:[%s0 + $0x108] sm:$0xff]
  %v48 = vld [vmem:[%s0 + $0x110] sm:$0xff]
  %v49 = vld [vmem:[%s0 + $0x118] sm:$0xff]
  %v50 = vld [vmem:[%s0 + $0x120] sm:$0xff]
  %v51 = vld [vmem:[%s0 + $0x128] sm:$0xff]
  %v52 = vld [vmem:[%s0 + $0x130] sm:$0xff]
  %v53 = vld [vmem:[%s0 + $0x138] sm:$0xff]
  %v54 = vld [vmem:[%s0 + $0x140] sm:$0xff]
  %v55 = vld [vmem:[%s0 + $0x148] sm:$0xff]
  %v56 = vld [vmem:[%s0 + $0x150] sm:$0xff]
  %v57 = vld [vmem:[%s0 + $0x158] sm:$0xff]
  %v58 = vld [vmem:[%s0 + $0x160] sm:$0xff]
  %v59 = vld [vmem:[%s0 + $0x168] sm:$0xff]
  %v60 = vld [vmem:[%s0 + $0x170] sm:$0xff]
  %v61 = vld [vmem:[%s0 + $0x178] sm:$0xff]
  %v62 = vld [vmem:[%s0 + $0x180] sm:$0xff]
  %v63 = vld [vmem:[%s0 + $0x188] sm:$0xff]
  %v64 = vld [vmem:[%s0 + $0x190] sm:$0xff]
  %v65 = vld [vmem:[%s0 + $0x198] sm:$0xff]
  %v66 = vld [vmem:[%s0 + $0x1a0] sm:$0xff]
  %v67 = vld [vmem:[%s0 + $0x1a8] sm:$0xff]
  %v68 = vld [vmem:[%s0 + $0x1b0] sm:$0xff]
  %v69 = vld [vmem:[%s0 + $0x1b8] sm:$0xff]
  %v70 = vld [vmem:[%s0 + $0x1c0] sm:$0xff]
  %v71 = vld [vmem:[%s0 + $0x1c8] sm:$0xff]
  %v72 = vld [vmem:[%s0 + $0x1d0] sm:$0xff]
  %v73 = vld [vmem:[%s0 + $0x1d8] sm:$0xff]
  %v74 = vld [vmem:[%s0 + $0x1e0] sm:$0xff]
  %v75 = vld [vmem:[%s0 + $0x1e8] sm:$0xff]
  %v76 = vld [vmem:[%s0 + $0x1f0] sm:$0xff]
  %v77 = vld [vmem:[%s0 + $0x1f8] sm:$0xff]
  %v78 = vld [vmem:[%s0 + $0x200] sm:$0xff]
  %v79 = vld [vmem:[%s0 + $0x208] sm:$0xff]
  %v80 = vld [vmem:[%s0 + $0x210] sm:$0xff]
  %v81 = vld [vmem:[%s0 + $0x218] sm:$0xff]
  %v82 = vld [vmem:[%s0 + $0x220] sm:$0xff]
  %v83 = vld [vmem:[%s0 + $0x228] sm:$0xff]
  %v84 = vld [vmem:[%s0 + $0x230] sm:$0xff]
  %v85 = vld [vmem:[%s0 + $0x238] sm:$0xff]
  %v86 = vld [vmem:[%s0 + $0x240] sm:$0xff]
  %v87 = vld [vmem:[%s0 + $0x248] sm:$0xff]
  %v88 = vld [vmem:[%s0 + $0x250] sm:$0xff]
  %v89 = vld [vmem:[%s0 + $0x258] sm:$0xff]
  %v90 = vld [vmem:[%s0 + $0x260] sm:$0xff]
  %v91 = vld [vmem:[%s0 + $0x268] sm:$0xff]
  %v92 = vld [vmem:[%s0 + $0x270] sm:$0xff]
  %v93 = vld [vmem:[%s0 + $0x278] sm:$0xff]
  %v94 = vld [vmem:[%s0 + $0x280] sm:$0xff]
  %v95 = vld [vmem:[%s0 + $0x288] sm:$0xff]
  %v96 = vld [vmem:[%s0 + $0x290] sm:$0xff]
  %v97 = vld [vmem:[%s0 + $0x298] sm:$0xff]
  %v98 = vld [vmem:[%s0 + $0x2a0] sm:$0xff]
  %v99 = vld [vmem:[%s0 + $0x2a8] sm:$0xff]
  %v100 = vld [vmem:[%s0 + $0x2b0] sm:$0xff]
  %v101 = vld [vmem:[%s0 + $0x2b8] sm:$0xff]
  %v102 = vld [vmem:[%s0 + $0x2c0] sm:$0xff]
  %v103 = vld [vmem:[%s0 + $0x2c8] sm:$0xff]
  %v104 = vld [vmem:[%s0 + $0x2d0] sm:$0xff]
  %v105 = vld [vmem:[%s0 + $0x2d8] sm:$0xff]
  %v106 = vld [vmem:[%s0 + $0x2e0] sm:$0xff]
  %v107 = vld [vmem:[%s0 + $0x2e8] sm:$0xff]
  %v108 = vld [vmem:[%s0 + $0x2f0] sm:$0xff]
  %v109 = vld [vmem:[%s0 + $0x2f8] sm:$0xff]
  %v110 = vld [vmem:[%s0 + $0x300] sm:$0xff]
  %v111 = vld [vmem:[%s0 + $0x308] sm:$0xff]
  %v112 = vld [vmem:[%s0 + $0x310] sm:$0xff]
  %v113 = vld [vmem:[%s0 + $0x318] sm:$0xff]
  %v114 = vld [vmem:[%s0 + $0x320] sm:$0xff]
  %v115 = vld [vmem:[%s0 + $0x328] sm:$0xff]
  %v116 = vld [vmem:[%s0 + $0x330] sm:$0xff]
  %v117 = vld [vmem:[%s0 + $0x338] sm:$0xff]
  %v118 = vld [vmem:[%s0 + $0x340] sm:$0xff]
  %v119 = vld [vmem:[%s0 + $0x348] sm:$0xff]
  %v120 = vld [vmem:[%s0 + $0x350] sm:$0xff]
  %v121 = vld [vmem:[%s0 + $0x358] sm:$0xff]
  %v122 = vld [vmem:[%s0 + $0x360] sm:$0xff]
  %v123 = vld [vmem:[%s0 + $0x368] sm:$0xff]
  %v124 = vld [vmem:[%s0 + $0x370] sm:$0xff]
  %v125 = vld [vmem:[%s0 + $0x378] sm:$0xff]
  %v126 = vld [vmem:[%s0 + $0x380] sm:$0xff]
  %v127 = vld [vmem:[%s0 + $0x388] sm:$0xff]
  %v128 = vld [vmem:[%s0 + $0x390] sm:$0xff]
  %v129 = vld [vmem:[%s0 + $0x398] sm:$0xff]
  %v130 = vld [vmem:[%s0 + $0x3a0] sm:$0xff]
  %v131 = vld [vmem:[%s0 + $0x3a8] sm:$0xff]
  %v132 = vld [vmem:[%s0 + $0x3b0] sm:$0xff]
  %v133 = vld [vmem:[%s0 + $0x3b8] sm:$0xff]
  %v134 = vld [vmem:[%s0 + $0x3c0] sm:$0xff]
  %v135 = vld [vmem:[%s0 + $0x3c8] sm:$0xff]
  %v136 = vld [vmem:[%s0 + $0x3d0] sm:$0xff]
  %v137 = vld [vmem:[%s0 + $0x3d8] sm:$0xff]
  %v138 = vld [vmem:[%s0 + $0x3e0] sm:$0xff]
  %v139 = vld [vmem:[%s0 + $0x3e8] sm:$0xff]
  %v140 = vld [vmem:[%s0 + $0x3f0] sm:$0xff]
  %v141 = vld [vmem:[%s0 + $0x3f8] sm:$0xff]
  %v142 = vld [vmem:[%s0 + $0x400] sm:$0xff]
  %v143 = vld [vmem:[%s0 + $0x408] sm:$0xff]
  %v144 = vld [vmem:[%s0 + $0x410] sm:$0xff]
  %v145 = vld [vmem:[%s0 + $0x418] sm:$0xff]
  %v146 = vld [vmem:[%s0 + $0x420] sm:$0xff]
  %v147 = vld [vmem:[%s0 + $0x428] sm:$0xff]
  %v148 = vld [vmem:[%s0 + $0x430] sm:$0xff]
  %v149 = vld [vmem:[%s0 + $0x438] sm:$0xff]
  %v150 = vld [vmem:[%s0 + $0x440] sm:$0xff]
  %v151 = vld [vmem:[%s0 + $0x448] sm:$0xff]
  %v152 = vld [vmem:[%s0 + $0x450] sm:$0xff]
  %v153 = vld [vmem:[%s0 + $0x458] sm:$0xff]
  %v154 = vld [vmem:[%s0 + $0x460] sm:$0xff]
  %v155 = vld [vmem:[%s0 + $0x468] sm:$0xff]
  %v156 = vld [vmem:[%s0 + $0x470] sm:$0xff]
  %v157 = vld [vmem:[%s0 + $0x478] sm:$0xff]
  %v158 = vld [vmem:[%s0 + $0x480] sm:$0xff]
  %v159 = vld [vmem:[%s0 + $0x488] sm:$0xff]
  %v160 = vld [vmem:[%s0 + $0x490] sm:$0xff]
  %v161 = vld [vmem:[%s0 + $0x498] sm:$0xff]
  %v162 = vld [vmem:[%s0 + $0x4a0] sm:$0xff]
  %v163 = vld [vmem:[%s0 + $0x4a8] sm:$0xff]
  %v164 = vld [vmem:[%s0 + $0x4b0] sm:$0xff]
  %v165 = vld [vmem:[%s0 + $0x4b8] sm:$0xff]
  %v166 = vld [vmem:[%s0 + $0x4c0] sm:$0xff]
  %v167 = vld [vmem:[%s0 + $0x4c8] sm:$0xff]
  %v168 = vld [vmem:[%s0 + $0x4d0] sm:$0xff]
  %v169 = vld [vmem:[%s0 + $0x4d8] sm:$0xff]
  %v170 = vld [vmem:[%s0 + $0x4e0] sm:$0xff]
  %v171 = vld [vmem:[%s0 + $0x4e8] sm:$0xff]
  %v172 = vld [vmem:[%s0 + $0x4f0] sm:$0xff]
  %v173 = vld [vmem:[%s0 + $0x4f8] sm:$0xff]
  %v174 = vld [vmem:[%s0 + $0x500] sm:$0xff]
  %v175 = vld [vmem:[%s0 + $0x508] sm:$0xff]
  %v176 = vld [vmem:[%s0 + $0x510] sm:$0xff]
  %v177 = vld [vmem:[%s0 + $0x518] sm:$0xff]
  %v178 = vld [vmem:[%s0 + $0x520] sm:$0xff]
  %v179 = vld [vmem:[%s0 + $0x528] sm:$0xff]
  %v180 = vld [vmem:[%s0 + $0x530] sm:$0xff]
  %v181 = vld [vmem:[%s0 + $0x538] sm:$0xff]
  %v182 = vld [vmem:[%s0 + $0x540] sm:$0xff]
  %v183 = vld [vmem:[%s0 + $0x548] sm:$0xff]
  %v184 = vld [vmem:[%s0 + $0x550] sm:$0xff]
  %v185 = vld [vmem:[%s0 + $0x558] sm:$0xff]
  %v186 = vld [vmem:[%s0 + $0x560] sm:$0xff]
  %v187 = vld [vmem:[%s0 + $0x568] sm:$0xff]
  %v188 = vld [vmem:[%s0 + $0x570] sm:$0xff]
  %v189 = vld [vmem:[%s0 + $0x578] sm:$0xff]
  %v190 = vld [vmem:[%s0 + $0x580] sm:$0xff]
  %v191 = vld [vmem:[%s0 + $0x588] sm:$0xff]
  %v192 = vld [vmem:[%s0 + $0x590] sm:$0xff]
  %v193 = vld [vmem:[%s0 + $0x598] sm:$0xff]
  %v194 = vld [vmem:[%s0 + $0x5a0] sm:$0xff]
  %v195 = vld [vmem:[%s0 + $0x5a8] sm:$0xff]
  %v196 = vld [vmem:[%s0 + $0x5b0] sm:$0xff]
  %v197 = vld [vmem:[%s0 + $0x5b8] sm:$0xff]
  %v198 = vld [vmem:[%s0 + $0x5c0] sm:$0xff]
  %v199 = vld [vmem:[%s0 + $0x5c8] sm:$0xff]
  %v200 = vld [vmem:[%s0 + $0x5d0] sm:$0xff]
  %v201 = vld [vmem:[%s0 + $0x5d8] sm:$0xff]
  %v202 = vld [vmem:[%s0 + $0x5e0] sm:$0xff]
  %v203 = vld [vmem:[%s0 + $0x5e8] sm:$0xff]
  %v204 = vld [vmem:[%s0 + $0x5f0] sm:$0xff]
  %v205 = vld [vmem:[%s0 + $0x5f8] sm:$0xff]
  %v206 = vpack.c.bf16 %v16, %v14
  %v207 = vpack.c.bf16 %v17, %v15
  %v208 = vpack.c.bf16 %v20, %v18
  %v209 = vpack.c.bf16 %v21, %v19
  %v210 = vpack.c.bf16 %v24, %v22
  %v211 = vpack.c.bf16 %v25, %v23
  %v212 = vpack.c.bf16 %v28, %v26
  %v213 = vpack.c.bf16 %v29, %v27
  %v214 = vpack.c.bf16 %v32, %v30
  %v215 = vpack.c.bf16 %v33, %v31
  %v216 = vpack.c.bf16 %v36, %v34
  %v217 = vpack.c.bf16 %v37, %v35
  %v218 = vpack.c.bf16 %v40, %v38
  %v219 = vpack.c.bf16 %v41, %v39
  %v220 = vpack.c.bf16 %v44, %v42
  %v221 = vpack.c.bf16 %v45, %v43
  %v222 = vpack.c.bf16 %v48, %v46
  %v223 = vpack.c.bf16 %v49, %v47
  %v224 = vpack.c.bf16 %v52, %v50
  %v225 = vpack.c.bf16 %v53, %v51
  %v226 = vpack.c.bf16 %v56, %v54
  %v227 = vpack.c.bf16 %v57, %v55
  %v228 = vpack.c.bf16 %v60, %v58
  %v229 = vpack.c.bf16 %v61, %v59
  %v230 = vpack.c.bf16 %v64, %v62
  %v231 = vpack.c.bf16 %v65, %v63
  %v232 = vpack.c.bf16 %v68, %v66
  %v233 = vpack.c.bf16 %v69, %v67
  %v234 = vpack.c.bf16 %v72, %v70
  %v235 = vpack.c.bf16 %v73, %v71
  %v236 = vpack.c.bf16 %v76, %v74
  %v237 = vpack.c.bf16 %v77, %v75
  %v238 = vpack.c.bf16 %v80, %v78
  %v239 = vpack.c.bf16 %v81, %v79
  %v240 = vpack.c.bf16 %v84, %v82
  %v241 = vpack.c.bf16 %v85, %v83
  %v242 = vpack.c.bf16 %v88, %v86
  %v243 = vpack.c.bf16 %v89, %v87
  %v244 = vpack.c.bf16 %v92, %v90
  %v245 = vpack.c.bf16 %v93, %v91
  %v246 = vpack.c.bf16 %v96, %v94
  %v247 = vpack.c.bf16 %v97, %v95
  %v248 = vpack.c.bf16 %v100, %v98
  %v249 = vpack.c.bf16 %v101, %v99
  %v250 = vpack.c.bf16 %v104, %v102
  %v251 = vpack.c.bf16 %v105, %v103
  %v252 = vpack.c.bf16 %v108, %v106
  %v253 = vpack.c.bf16 %v109, %v107
  %v254 = vpack.c.bf16 %v112, %v110
  %v255 = vpack.c.bf16 %v113, %v111
  %v256 = vpack.c.bf16 %v116, %v114
  %v257 = vpack.c.bf16 %v117, %v115
  %v258 = vpack.c.bf16 %v120, %v118
  %v259 = vpack.c.bf16 %v121, %v119
  %v260 = vpack.c.bf16 %v124, %v122
  %v261 = vpack.c.bf16 %v125, %v123
  %v262 = vpack.c.bf16 %v128, %v126
  %v263 = vpack.c.bf16 %v129, %v127
  %v264 = vpack.c.bf16 %v132, %v130
  %v265 = vpack.c.bf16 %v133, %v131
  %v266 = vpack.c.bf16 %v136, %v134
  %v267 = vpack.c.bf16 %v137, %v135
  %v268 = vpack.c.bf16 %v140, %v138
  %v269 = vpack.c.bf16 %v141, %v139
  %v270 = vpack.c.bf16 %v144, %v142
  %v271 = vpack.c.bf16 %v145, %v143
  %v272 = vpack.c.bf16 %v148, %v146
  %v273 = vpack.c.bf16 %v149, %v147
  %v274 = vpack.c.bf16 %v152, %v150
  %v275 = vpack.c.bf16 %v153, %v151
  %v276 = vpack.c.bf16 %v156, %v154
  %v277 = vpack.c.bf16 %v157, %v155
  %v278 = vpack.c.bf16 %v160, %v158
  %v279 = vpack.c.bf16 %v161, %v159
  %v280 = vpack.c.bf16 %v164, %v162
  %v281 = vpack.c.bf16 %v165, %v163
  %v282 = vpack.c.bf16 %v168, %v166
  %v283 = vpack.c.bf16 %v169, %v167
  %v284 = vpack.c.bf16 %v172, %v170
  %v285 = vpack.c.bf16 %v173, %v171
  %v286 = vpack.c.bf16 %v176, %v174
  %v287 = vpack.c.bf16 %v177, %v175
  %v288 = vpack.c.bf16 %v180, %v178
  %v289 = vpack.c.bf16 %v181, %v179
  %v290 = vpack.c.bf16 %v184, %v182
  %v291 = vpack.c.bf16 %v185, %v183
  %v292 = vpack.c.bf16 %v188, %v186
  %v293 = vpack.c.bf16 %v189, %v187
  %v294 = vpack.c.bf16 %v192, %v190
  %v295 = vpack.c.bf16 %v193, %v191
  %v296 = vpack.c.bf16 %v196, %v194
  %v297 = vpack.c.bf16 %v197, %v195
  %v298 = vpack.c.bf16 %v200, %v198
  %v299 = vpack.c.bf16 %v201, %v199
  %v300 = vpack.c.bf16 %v204, %v202
  %v301 = vpack.c.bf16 %v205, %v203
  %v302 = vld [vmem:[%s1] sm:$0xff]
  %v303 = vld [vmem:[%s1 + $0x8] sm:$0xff]
  %v304 = vld [vmem:[%s1 + $0x10] sm:$0xff]
  %v305 = vld [vmem:[%s1 + $0x18] sm:$0xff]
  %v306 = vld [vmem:[%s1 + $0x20] sm:$0xff]
  %v307 = vld [vmem:[%s1 + $0x28] sm:$0xff]
  %v308 = vld [vmem:[%s1 + $0x30] sm:$0xff]
  %v309 = vld [vmem:[%s1 + $0x38] sm:$0xff]
  %v310 = vld [vmem:[%s1 + $0x40] sm:$0xff]
  %v311 = vld [vmem:[%s1 + $0x48] sm:$0xff]
  %v312 = vld [vmem:[%s1 + $0x50] sm:$0xff]
  %v313 = vld [vmem:[%s1 + $0x58] sm:$0xff]
  %v314 = vld [vmem:[%s1 + $0x60] sm:$0xff]
  %v315 = vld [vmem:[%s1 + $0x68] sm:$0xff]
  %v316 = vld [vmem:[%s1 + $0x70] sm:$0xff]
  %v317 = vld [vmem:[%s1 + $0x78] sm:$0xff]
  %v318 = vld [vmem:[%s1 + $0x80] sm:$0xff]
  %v319 = vld [vmem:[%s1 + $0x88] sm:$0xff]
  %v320 = vld [vmem:[%s1 + $0x90] sm:$0xff]
  %v321 = vld [vmem:[%s1 + $0x98] sm:$0xff]
  %v322 = vld [vmem:[%s1 + $0xa0] sm:$0xff]
  %v323 = vld [vmem:[%s1 + $0xa8] sm:$0xff]
  %v324 = vld [vmem:[%s1 + $0xb0] sm:$0xff]
  %v325 = vld [vmem:[%s1 + $0xb8] sm:$0xff]
  %v326 = vld [vmem:[%s1 + $0xc0] sm:$0xff]
  %v327 = vld [vmem:[%s1 + $0xc8] sm:$0xff]
  %v328 = vld [vmem:[%s1 + $0xd0] sm:$0xff]
  %v329 = vld [vmem:[%s1 + $0xd8] sm:$0xff]
  %v330 = vld [vmem:[%s1 + $0xe0] sm:$0xff]
  %v331 = vld [vmem:[%s1 + $0xe8] sm:$0xff]
  %v332 = vld [vmem:[%s1 + $0xf0] sm:$0xff]
  %v333 = vld [vmem:[%s1 + $0xf8] sm:$0xff]
  %v334 = vld [vmem:[%s1 + $0x100] sm:$0xff]
  %v335 = vld [vmem:[%s1 + $0x108] sm:$0xff]
  %v336 = vld [vmem:[%s1 + $0x110] sm:$0xff]
  %v337 = vld [vmem:[%s1 + $0x118] sm:$0xff]
  %v338 = vld [vmem:[%s1 + $0x120] sm:$0xff]
  %v339 = vld [vmem:[%s1 + $0x128] sm:$0xff]
  %v340 = vld [vmem:[%s1 + $0x130] sm:$0xff]
  %v341 = vld [vmem:[%s1 + $0x138] sm:$0xff]
  %v342 = vld [vmem:[%s1 + $0x140] sm:$0xff]
  %v343 = vld [vmem:[%s1 + $0x148] sm:$0xff]
  %v344 = vld [vmem:[%s1 + $0x150] sm:$0xff]
  %v345 = vld [vmem:[%s1 + $0x158] sm:$0xff]
  %v346 = vld [vmem:[%s1 + $0x160] sm:$0xff]
  %v347 = vld [vmem:[%s1 + $0x168] sm:$0xff]
  %v348 = vld [vmem:[%s1 + $0x170] sm:$0xff]
  %v349 = vld [vmem:[%s1 + $0x178] sm:$0xff]
  %v350 = vld [vmem:[%s1 + $0x180] sm:$0xff]
  %v351 = vld [vmem:[%s1 + $0x188] sm:$0xff]
  %v352 = vld [vmem:[%s1 + $0x190] sm:$0xff]
  %v353 = vld [vmem:[%s1 + $0x198] sm:$0xff]
  %v354 = vld [vmem:[%s1 + $0x1a0] sm:$0xff]
  %v355 = vld [vmem:[%s1 + $0x1a8] sm:$0xff]
  %v356 = vld [vmem:[%s1 + $0x1b0] sm:$0xff]
  %v357 = vld [vmem:[%s1 + $0x1b8] sm:$0xff]
  %v358 = vld [vmem:[%s1 + $0x1c0] sm:$0xff]
  %v359 = vld [vmem:[%s1 + $0x1c8] sm:$0xff]
  %v360 = vld [vmem:[%s1 + $0x1d0] sm:$0xff]
  %v361 = vld [vmem:[%s1 + $0x1d8] sm:$0xff]
  %v362 = vld [vmem:[%s1 + $0x1e0] sm:$0xff]
  %v363 = vld [vmem:[%s1 + $0x1e8] sm:$0xff]
  %v364 = vld [vmem:[%s1 + $0x1f0] sm:$0xff]
  %v365 = vld [vmem:[%s1 + $0x1f8] sm:$0xff]
  %v366 = vld [vmem:[%s1 + $0x200] sm:$0xff]
  %v367 = vld [vmem:[%s1 + $0x208] sm:$0xff]
  %v368 = vld [vmem:[%s1 + $0x210] sm:$0xff]
  %v369 = vld [vmem:[%s1 + $0x218] sm:$0xff]
  %v370 = vld [vmem:[%s1 + $0x220] sm:$0xff]
  %v371 = vld [vmem:[%s1 + $0x228] sm:$0xff]
  %v372 = vld [vmem:[%s1 + $0x230] sm:$0xff]
  %v373 = vld [vmem:[%s1 + $0x238] sm:$0xff]
  %v446 = vunpack.c.l.b16 %v302
  %v447 = vunpack.c.h.b16 %v302
  %v448 = vunpack.c.l.b16 %v303
  %v449 = vunpack.c.h.b16 %v303
  %v450 = vunpack.c.l.b16 %v304
  %v451 = vunpack.c.h.b16 %v304
  %v452 = vunpack.c.l.b16 %v305
  %v453 = vunpack.c.h.b16 %v305
  %v454 = vunpack.c.l.b16 %v306
  %v455 = vunpack.c.h.b16 %v306
  %v456 = vunpack.c.l.b16 %v307
  %v457 = vunpack.c.h.b16 %v307
  %v458 = vunpack.c.l.b16 %v308
  %v459 = vunpack.c.h.b16 %v308
  %v460 = vunpack.c.l.b16 %v309
  %v461 = vunpack.c.h.b16 %v309
  %v462 = vunpack.c.l.b16 %v310
  %v463 = vunpack.c.h.b16 %v310
  %v464 = vunpack.c.l.b16 %v311
  %v465 = vunpack.c.h.b16 %v311
  %v466 = vunpack.c.l.b16 %v312
  %v467 = vunpack.c.h.b16 %v312
  %v468 = vunpack.c.l.b16 %v313
  %v469 = vunpack.c.h.b16 %v313
  %v470 = vunpack.c.l.b16 %v314
  %v471 = vunpack.c.h.b16 %v314
  %v472 = vunpack.c.l.b16 %v315
  %v473 = vunpack.c.h.b16 %v315
  %v474 = vunpack.c.l.b16 %v316
  %v475 = vunpack.c.h.b16 %v316
  %v476 = vunpack.c.l.b16 %v317
  %v477 = vunpack.c.h.b16 %v317
  %v478 = vunpack.c.l.b16 %v318
  %v479 = vunpack.c.h.b16 %v318
  %v480 = vunpack.c.l.b16 %v319
  %v481 = vunpack.c.h.b16 %v319
  %v482 = vunpack.c.l.b16 %v320
  %v483 = vunpack.c.h.b16 %v320
  %v484 = vunpack.c.l.b16 %v321
  %v485 = vunpack.c.h.b16 %v321
  %v486 = vunpack.c.l.b16 %v322
  %v487 = vunpack.c.h.b16 %v322
  %v488 = vunpack.c.l.b16 %v323
  %v489 = vunpack.c.h.b16 %v323
  %v490 = vunpack.c.l.b16 %v324
  %v491 = vunpack.c.h.b16 %v324
  %v492 = vunpack.c.l.b16 %v325
  %v493 = vunpack.c.h.b16 %v325
  %v494 = vunpack.c.l.b16 %v326
  %v495 = vunpack.c.h.b16 %v326
  %v496 = vunpack.c.l.b16 %v327
  %v497 = vunpack.c.h.b16 %v327
  %v498 = vunpack.c.l.b16 %v328
  %v499 = vunpack.c.h.b16 %v328
  %v500 = vunpack.c.l.b16 %v329
  %v501 = vunpack.c.h.b16 %v329
  %v502 = vunpack.c.l.b16 %v330
  %v503 = vunpack.c.h.b16 %v330
  %v504 = vunpack.c.l.b16 %v331
  %v505 = vunpack.c.h.b16 %v331
  %v506 = vunpack.c.l.b16 %v332
  %v507 = vunpack.c.h.b16 %v332
  %v508 = vunpack.c.l.b16 %v333
  %v509 = vunpack.c.h.b16 %v333
  %v510 = vunpack.c.l.b16 %v334
  %v511 = vunpack.c.h.b16 %v334
  %v512 = vunpack.c.l.b16 %v335
  %v513 = vunpack.c.h.b16 %v335
  %v514 = vunpack.c.l.b16 %v336
  %v515 = vunpack.c.h.b16 %v336
  %v516 = vunpack.c.l.b16 %v337
  %v517 = vunpack.c.h.b16 %v337
  %v518 = vunpack.c.l.b16 %v338
  %v519 = vunpack.c.h.b16 %v338
  %v520 = vunpack.c.l.b16 %v339
  %v521 = vunpack.c.h.b16 %v339
  %v522 = vunpack.c.l.b16 %v340
  %v523 = vunpack.c.h.b16 %v340
  %v524 = vunpack.c.l.b16 %v341
  %v525 = vunpack.c.h.b16 %v341
  %v526 = vunpack.c.l.b16 %v342
  %v527 = vunpack.c.h.b16 %v342
  %v528 = vunpack.c.l.b16 %v343
  %v529 = vunpack.c.h.b16 %v343
  %v530 = vunpack.c.l.b16 %v344
  %v531 = vunpack.c.h.b16 %v344
  %v532 = vunpack.c.l.b16 %v345
  %v533 = vunpack.c.h.b16 %v345
  %v534 = vunpack.c.l.b16 %v346
  %v535 = vunpack.c.h.b16 %v346
  %v536 = vunpack.c.l.b16 %v347
  %v537 = vunpack.c.h.b16 %v347
  %v538 = vunpack.c.l.b16 %v348
  %v539 = vunpack.c.h.b16 %v348
  %v540 = vunpack.c.l.b16 %v349
  %v541 = vunpack.c.h.b16 %v349
  %v542 = vunpack.c.l.b16 %v350
  %v543 = vunpack.c.h.b16 %v350
  %v544 = vunpack.c.l.b16 %v351
  %v545 = vunpack.c.h.b16 %v351
  %v546 = vunpack.c.l.b16 %v352
  %v547 = vunpack.c.h.b16 %v352
  %v548 = vunpack.c.l.b16 %v353
  %v549 = vunpack.c.h.b16 %v353
  %v550 = vunpack.c.l.b16 %v354
  %v551 = vunpack.c.h.b16 %v354
  %v552 = vunpack.c.l.b16 %v355
  %v553 = vunpack.c.h.b16 %v355
  %v554 = vunpack.c.l.b16 %v356
  %v555 = vunpack.c.h.b16 %v356
  %v556 = vunpack.c.l.b16 %v357
  %v557 = vunpack.c.h.b16 %v357
  %v558 = vunpack.c.l.b16 %v358
  %v559 = vunpack.c.h.b16 %v358
  %v560 = vunpack.c.l.b16 %v359
  %v561 = vunpack.c.h.b16 %v359
  %v562 = vunpack.c.l.b16 %v360
  %v563 = vunpack.c.h.b16 %v360
  %v564 = vunpack.c.l.b16 %v361
  %v565 = vunpack.c.h.b16 %v361
  %v566 = vunpack.c.l.b16 %v362
  %v567 = vunpack.c.h.b16 %v362
  %v568 = vunpack.c.l.b16 %v363
  %v569 = vunpack.c.h.b16 %v363
  %v570 = vunpack.c.l.b16 %v364
  %v571 = vunpack.c.h.b16 %v364
  %v572 = vunpack.c.l.b16 %v365
  %v573 = vunpack.c.h.b16 %v365
  %v574 = vunpack.c.l.b16 %v366
  %v575 = vunpack.c.h.b16 %v366
  %v576 = vunpack.c.l.b16 %v367
  %v577 = vunpack.c.h.b16 %v367
  %v578 = vunpack.c.l.b16 %v368
  %v579 = vunpack.c.h.b16 %v368
  %v580 = vunpack.c.l.b16 %v369
  %v581 = vunpack.c.h.b16 %v369
  %v582 = vunpack.c.l.b16 %v370
  %v583 = vunpack.c.h.b16 %v370
  %v584 = vunpack.c.l.b16 %v371
  %v585 = vunpack.c.h.b16 %v371
  %v586 = vunpack.c.l.b16 %v372
  %v587 = vunpack.c.h.b16 %v372
  %v588 = vunpack.c.l.b16 %v373
  %v589 = vunpack.c.h.b16 %v373
  %v590 = vpack.c.b16 %v452, %v446
  %v591 = vpack.c.b16 %v453, %v447
  %v592 = vpack.c.b16 %v454, %v448
  %v593 = vpack.c.b16 %v455, %v449
  %v594 = vpack.c.b16 %v456, %v450
  %v595 = vpack.c.b16 %v457, %v451
  %v596 = vpack.c.b16 %v464, %v458
  %v597 = vpack.c.b16 %v465, %v459
  %v598 = vpack.c.b16 %v466, %v460
  %v599 = vpack.c.b16 %v467, %v461
  %v600 = vpack.c.b16 %v468, %v462
  %v601 = vpack.c.b16 %v469, %v463
  %v602 = vpack.c.b16 %v476, %v470
  %v603 = vpack.c.b16 %v477, %v471
  %v604 = vpack.c.b16 %v478, %v472
  %v605 = vpack.c.b16 %v479, %v473
  %v606 = vpack.c.b16 %v480, %v474
  %v607 = vpack.c.b16 %v481, %v475
  %v608 = vpack.c.b16 %v488, %v482
  %v609 = vpack.c.b16 %v489, %v483
  %v610 = vpack.c.b16 %v490, %v484
  %v611 = vpack.c.b16 %v491, %v485
  %v612 = vpack.c.b16 %v492, %v486
  %v613 = vpack.c.b16 %v493, %v487
  %v614 = vpack.c.b16 %v500, %v494
  %v615 = vpack.c.b16 %v501, %v495
  %v616 = vpack.c.b16 %v502, %v496
  %v617 = vpack.c.b16 %v503, %v497
  %v618 = vpack.c.b16 %v504, %v498
  %v619 = vpack.c.b16 %v505, %v499
  %v620 = vpack.c.b16 %v512, %v506
  %v621 = vpack.c.b16 %v513, %v507
  %v622 = vpack.c.b16 %v514, %v508
  %v623 = vpack.c.b16 %v515, %v509
  %v624 = vpack.c.b16 %v516, %v510
  %v625 = vpack.c.b16 %v517, %v511
  %v626 = vpack.c.b16 %v524, %v518
  %v627 = vpack.c.b16 %v525, %v519
  %v628 = vpack.c.b16 %v526, %v520
  %v629 = vpack.c.b16 %v527, %v521
  %v630 = vpack.c.b16 %v528, %v522
  %v631 = vpack.c.b16 %v529, %v523
  %v632 = vpack.c.b16 %v536, %v530
  %v633 = vpack.c.b16 %v537, %v531
  %v634 = vpack.c.b16 %v538, %v532
  %v635 = vpack.c.b16 %v539, %v533
  %v636 = vpack.c.b16 %v540, %v534
  %v637 = vpack.c.b16 %v541, %v535
  %v638 = vpack.c.b16 %v548, %v542
  %v639 = vpack.c.b16 %v549, %v543
  %v640 = vpack.c.b16 %v550, %v544
  %v641 = vpack.c.b16 %v551, %v545
  %v642 = vpack.c.b16 %v552, %v546
  %v643 = vpack.c.b16 %v553, %v547
  %v644 = vpack.c.b16 %v560, %v554
  %v645 = vpack.c.b16 %v561, %v555
  %v646 = vpack.c.b16 %v562, %v556
  %v647 = vpack.c.b16 %v563, %v557
  %v648 = vpack.c.b16 %v564, %v558
  %v649 = vpack.c.b16 %v565, %v559
  %v650 = vpack.c.b16 %v572, %v566
  %v651 = vpack.c.b16 %v573, %v567
  %v652 = vpack.c.b16 %v574, %v568
  %v653 = vpack.c.b16 %v575, %v569
  %v654 = vpack.c.b16 %v576, %v570
  %v655 = vpack.c.b16 %v577, %v571
  %v656 = vpack.c.b16 %v584, %v578
  %v657 = vpack.c.b16 %v585, %v579
  %v658 = vpack.c.b16 %v586, %v580
  %v659 = vpack.c.b16 %v587, %v581
  %v660 = vpack.c.b16 %v588, %v582
  %v661 = vpack.c.b16 %v589, %v583
  %734 = vmatprep.subr.bf16.mxu0 %v207
  %735 = vmatpush1.bf16.msra.mxu0 %v206
  %736 = vmatprep.subr.bf16.mxu0 %v209
  %737 = vmatpush1.bf16.msra.mxu0 %v208
  %738 = vmatprep.subr.bf16.mxu0 %v211
  %739 = vmatpush1.bf16.msra.mxu0 %v210
  %740 = vmatprep.subr.bf16.mxu0 %v213
  %741 = vmatpush1.bf16.msra.mxu0 %v212
  %742 = vmatprep.subr.bf16.mxu0 %v215
  %743 = vmatpush1.bf16.msra.mxu0 %v214
  %744 = vmatprep.subr.bf16.mxu0 %v217
  %745 = vmatpush1.bf16.msra.mxu0 %v216
  %746 = vmatprep.subr.bf16.mxu0 %v219
  %747 = vmatpush1.bf16.msra.mxu0 %v218
  %748 = vmatprep.subr.bf16.mxu0 %v221
  %749 = vmatpush1.bf16.msra.mxu0 %v220
  %750 = vmatprep.subr.bf16.mxu0 %v223
  %751 = vmatpush1.bf16.msra.mxu0 %v222
  %752 = vmatprep.subr.bf16.mxu0 %v225
  %753 = vmatpush1.bf16.msra.mxu0 %v224
  %754 = vmatprep.subr.bf16.mxu0 %v227
  %755 = vmatpush1.bf16.msra.mxu0 %v226
  %756 = vmatprep.subr.bf16.mxu0 %v229
  %757 = vmatpush1.bf16.msra.mxu0 %v228
  %758 = vmatprep.subr.bf16.mxu0 %v231
  %759 = vmatpush1.bf16.msra.mxu0 %v230
  %760 = vmatprep.subr.bf16.mxu0 %v233
  %761 = vmatpush1.bf16.msra.mxu0 %v232
  %762 = vmatprep.subr.bf16.mxu0 %v235
  %763 = vmatpush1.bf16.msra.mxu0 %v234
  %764 = vmatprep.subr.bf16.mxu0 %v237
  %765 = vmatpush1.bf16.msra.mxu0 %v236
  %766 = vmatprep.mubr.bf16.mxu0 %v591
  %767 = vmatmul.mubr.bf16.gmra.mrb[0].mxu0 %v590
  %v768 = vpop.f32.mrb[0].mxu0
  %v769 = vadd.f32 0.0, %v768
  %v770 = vpop.f32.mrb[0].mxu0
  %v771 = vadd.f32 0.0, %v770
  %v772 = vpop.f32.mrb[0].mxu0
  %v773 = vadd.f32 0.0, %v772
  %v774 = vpop.f32.mrb[0].mxu0
  %v775 = vadd.f32 0.0, %v774
  %776 = vmatprep.mubr.bf16.mxu0 %v597
  %777 = vmatmul.mubr.bf16.gmra.mrb[0].mxu0 %v596
  %v778 = vpop.f32.mrb[0].mxu0
  %v779 = vadd.f32 0.0, %v778
  %v780 = vpop.f32.mrb[0].mxu0
  %v781 = vadd.f32 0.0, %v780
  %v782 = vpop.f32.mrb[0].mxu0
  %v783 = vadd.f32 0.0, %v782
  %v784 = vpop.f32.mrb[0].mxu0
  %v785 = vadd.f32 0.0, %v784
  %786 = vmatprep.mubr.bf16.mxu0 %v603
  %787 = vmatmul.mubr.bf16.gmra.mrb[0].mxu0 %v602
  %v788 = vpop.f32.mrb[0].mxu0
  %v789 = vadd.f32 0.0, %v788
  %v790 = vpop.f32.mrb[0].mxu0
  %v791 = vadd.f32 0.0, %v790
  %v792 = vpop.f32.mrb[0].mxu0
  %v793 = vadd.f32 0.0, %v792
  %v794 = vpop.f32.mrb[0].mxu0
  %v795 = vadd.f32 0.0, %v794
  %796 = vmatprep.mubr.bf16.mxu0 %v609
  %797 = vmatmul.mubr.bf16.gmra.mrb[0].mxu0 %v608
  %v798 = vpop.f32.mrb[0].mxu0
  %v799 = vadd.f32 0.0, %v798
  %v800 = vpop.f32.mrb[0].mxu0
  %v801 = vadd.f32 0.0, %v800
  %v802 = vpop.f32.mrb[0].mxu0
  %v803 = vadd.f32 0.0, %v802
  %v804 = vpop.f32.mrb[0].mxu0
  %v805 = vadd.f32 0.0, %v804
  %806 = vmatprep.mubr.bf16.mxu0 %v615
  %807 = vmatmul.mubr.bf16.gmra.mrb[0].mxu0 %v614
  %v808 = vpop.f32.mrb[0].mxu0
  %v809 = vadd.f32 0.0, %v808
  %v810 = vpop.f32.mrb[0].mxu0
  %v811 = vadd.f32 0.0, %v810
  %v812 = vpop.f32.mrb[0].mxu0
  %v813 = vadd.f32 0.0, %v812
  %v814 = vpop.f32.mrb[0].mxu0
  %v815 = vadd.f32 0.0, %v814
  %816 = vmatprep.mubr.bf16.mxu0 %v621
  %817 = vmatmul.mubr.bf16.gmra.mrb[0].mxu0 %v620
  %v818 = vpop.f32.mrb[0].mxu0
  %v819 = vadd.f32 0.0, %v818
  %v820 = vpop.f32.mrb[0].mxu0
  %v821 = vadd.f32 0.0, %v820
  %v822 = vpop.f32.mrb[0].mxu0
  %v823 = vadd.f32 0.0, %v822
  %v824 = vpop.f32.mrb[0].mxu0
  %v825 = vadd.f32 0.0, %v824
  %826 = vmatprep.mubr.bf16.mxu0 %v627
  %827 = vmatmul.mubr.bf16.gmra.mrb[0].mxu0 %v626
  %v828 = vpop.f32.mrb[0].mxu0
  %v829 = vadd.f32 0.0, %v828
  %v830 = vpop.f32.mrb[0].mxu0
  %v831 = vadd.f32 0.0, %v830
  %v832 = vpop.f32.mrb[0].mxu0
  %v833 = vadd.f32 0.0, %v832
  %v834 = vpop.f32.mrb[0].mxu0
  %v835 = vadd.f32 0.0, %v834
  %836 = vmatprep.mubr.bf16.mxu0 %v633
  %837 = vmatmul.mubr.bf16.gmra.mrb[0].mxu0 %v632
  %v838 = vpop.f32.mrb[0].mxu0
  %v839 = vadd.f32 0.0, %v838
  %v840 = vpop.f32.mrb[0].mxu0
  %v841 = vadd.f32 0.0, %v840
  %v842 = vpop.f32.mrb[0].mxu0
  %v843 = vadd.f32 0.0, %v842
  %v844 = vpop.f32.mrb[0].mxu0
  %v845 = vadd.f32 0.0, %v844
  %846 = vmatprep.mubr.bf16.mxu0 %v639
  %847 = vmatmul.mubr.bf16.gmra.mrb[0].mxu0 %v638
  %v848 = vpop.f32.mrb[0].mxu0
  %v849 = vadd.f32 0.0, %v848
  %v850 = vpop.f32.mrb[0].mxu0
  %v851 = vadd.f32 0.0, %v850
  %v852 = vpop.f32.mrb[0].mxu0
  %v853 = vadd.f32 0.0, %v852
  %v854 = vpop.f32.mrb[0].mxu0
  %v855 = vadd.f32 0.0, %v854
  %856 = vmatprep.mubr.bf16.mxu0 %v645
  %857 = vmatmul.mubr.bf16.gmra.mrb[0].mxu0 %v644
  %v858 = vpop.f32.mrb[0].mxu0
  %v859 = vadd.f32 0.0, %v858
  %v860 = vpop.f32.mrb[0].mxu0
  %v861 = vadd.f32 0.0, %v860
  %v862 = vpop.f32.mrb[0].mxu0
  %v863 = vadd.f32 0.0, %v862
  %v864 = vpop.f32.mrb[0].mxu0
  %v865 = vadd.f32 0.0, %v864
  %866 = vmatprep.mubr.bf16.mxu0 %v651
  %867 = vmatmul.mubr.bf16.gmra.mrb[0].mxu0 %v650
  %v868 = vpop.f32.mrb[0].mxu0
  %v869 = vadd.f32 0.0, %v868
  %v870 = vpop.f32.mrb[0].mxu0
  %v871 = vadd.f32 0.0, %v870
  %v872 = vpop.f32.mrb[0].mxu0
  %v873 = vadd.f32 0.0, %v872
  %v874 = vpop.f32.mrb[0].mxu0
  %v875 = vadd.f32 0.0, %v874
  %876 = vmatprep.mubr.bf16.mxu0 %v657
  %877 = vmatmul.mubr.bf16.gmra.mrb[0].mxu0 %v656
  %v878 = vpop.f32.mrb[0].mxu0
  %v879 = vadd.f32 0.0, %v878
  %v880 = vpop.f32.mrb[0].mxu0
  %v881 = vadd.f32 0.0, %v880
  %v882 = vpop.f32.mrb[0].mxu0
  %v883 = vadd.f32 0.0, %v882
  %v884 = vpop.f32.mrb[0].mxu0
  %v885 = vadd.f32 0.0, %v884
  %886 = vdwg.mxu0
  %887 = vmatprep.subr.bf16.mxu0 %v239
  %888 = vmatpush1.bf16.msra.mxu0 %v238
  %889 = vmatprep.subr.bf16.mxu0 %v241
  %890 = vmatpush1.bf16.msra.mxu0 %v240
  %891 = vmatprep.subr.bf16.mxu0 %v243
  %892 = vmatpush1.bf16.msra.mxu0 %v242
  %893 = vmatprep.subr.bf16.mxu0 %v245
  %894 = vmatpush1.bf16.msra.mxu0 %v244
  %895 = vmatprep.subr.bf16.mxu0 %v247
  %896 = vmatpush1.bf16.msra.mxu0 %v246
  %897 = vmatprep.subr.bf16.mxu0 %v249
  %898 = vmatpush1.bf16.msra.mxu0 %v248
  %899 = vmatprep.subr.bf16.mxu0 %v251
  %900 = vmatpush1.bf16.msra.mxu0 %v250
  %901 = vmatprep.subr.bf16.mxu0 %v253
  %902 = vmatpush1.bf16.msra.mxu0 %v252
  %903 = vmatprep.subr.bf16.mxu0 %v255
  %904 = vmatpush1.bf16.msra.mxu0 %v254
  %905 = vmatprep.subr.bf16.mxu0 %v257
  %906 = vmatpush1.bf16.msra.mxu0 %v256
  %907 = vmatprep.subr.bf16.mxu0 %v259
  %908 = vmatpush1.bf16.msra.mxu0 %v258
  %909 = vmatprep.subr.bf16.mxu0 %v261
  %910 = vmatpush1.bf16.msra.mxu0 %v260
  %911 = vmatprep.subr.bf16.mxu0 %v263
  %912 = vmatpush1.bf16.msra.mxu0 %v262
  %913 = vmatprep.subr.bf16.mxu0 %v265
  %914 = vmatpush1.bf16.msra.mxu0 %v264
  %915 = vmatprep.subr.bf16.mxu0 %v267
  %916 = vmatpush1.bf16.msra.mxu0 %v266
  %917 = vmatprep.subr.bf16.mxu0 %v269
  %918 = vmatpush1.bf16.msra.mxu0 %v268
  %919 = vmatprep.mubr.bf16.mxu0 %v593
  %920 = vmatmul.mubr.bf16.gmra.mrb[0].mxu0 %v592
  %v921 = vpop.f32.mrb[0].mxu0
  %v922 = vadd.f32 %v769, %v921
  %v923 = vpop.f32.mrb[0].mxu0
  %v924 = vadd.f32 %v771, %v923
  %v925 = vpop.f32.mrb[0].mxu0
  %v926 = vadd.f32 %v773, %v925
  %v927 = vpop.f32.mrb[0].mxu0
  %v928 = vadd.f32 %v775, %v927
  %929 = vmatprep.mubr.bf16.mxu0 %v599
  %930 = vmatmul.mubr.bf16.gmra.mrb[0].mxu0 %v598
  %v931 = vpop.f32.mrb[0].mxu0
  %v932 = vadd.f32 %v779, %v931
  %v933 = vpop.f32.mrb[0].mxu0
  %v934 = vadd.f32 %v781, %v933
  %v935 = vpop.f32.mrb[0].mxu0
  %v936 = vadd.f32 %v783, %v935
  %v937 = vpop.f32.mrb[0].mxu0
  %v938 = vadd.f32 %v785, %v937
  %939 = vmatprep.mubr.bf16.mxu0 %v605
  %940 = vmatmul.mubr.bf16.gmra.mrb[0].mxu0 %v604
  %v941 = vpop.f32.mrb[0].mxu0
  %v942 = vadd.f32 %v789, %v941
  %v943 = vpop.f32.mrb[0].mxu0
  %v944 = vadd.f32 %v791, %v943
  %v945 = vpop.f32.mrb[0].mxu0
  %v946 = vadd.f32 %v793, %v945
  %v947 = vpop.f32.mrb[0].mxu0
  %v948 = vadd.f32 %v795, %v947
  %949 = vmatprep.mubr.bf16.mxu0 %v611
  %950 = vmatmul.mubr.bf16.gmra.mrb[0].mxu0 %v610
  %v951 = vpop.f32.mrb[0].mxu0
  %v952 = vadd.f32 %v799, %v951
  %v953 = vpop.f32.mrb[0].mxu0
  %v954 = vadd.f32 %v801, %v953
  %v955 = vpop.f32.mrb[0].mxu0
  %v956 = vadd.f32 %v803, %v955
  %v957 = vpop.f32.mrb[0].mxu0
  %v958 = vadd.f32 %v805, %v957
  %959 = vmatprep.mubr.bf16.mxu0 %v617
  %960 = vmatmul.mubr.bf16.gmra.mrb[0].mxu0 %v616
  %v961 = vpop.f32.mrb[0].mxu0
  %v962 = vadd.f32 %v809, %v961
  %v963 = vpop.f32.mrb[0].mxu0
  %v964 = vadd.f32 %v811, %v963
  %v965 = vpop.f32.mrb[0].mxu0
  %v966 = vadd.f32 %v813, %v965
  %v967 = vpop.f32.mrb[0].mxu0
  %v968 = vadd.f32 %v815, %v967
  %969 = vmatprep.mubr.bf16.mxu0 %v623
  %970 = vmatmul.mubr.bf16.gmra.mrb[0].mxu0 %v622
  %v971 = vpop.f32.mrb[0].mxu0
  %v972 = vadd.f32 %v819, %v971
  %v973 = vpop.f32.mrb[0].mxu0
  %v974 = vadd.f32 %v821, %v973
  %v975 = vpop.f32.mrb[0].mxu0
  %v976 = vadd.f32 %v823, %v975
  %v977 = vpop.f32.mrb[0].mxu0
  %v978 = vadd.f32 %v825, %v977
  %979 = vmatprep.mubr.bf16.mxu0 %v629
  %980 = vmatmul.mubr.bf16.gmra.mrb[0].mxu0 %v628
  %v981 = vpop.f32.mrb[0].mxu0
  %v982 = vadd.f32 %v829, %v981
  %v983 = vpop.f32.mrb[0].mxu0
  %v984 = vadd.f32 %v831, %v983
  %v985 = vpop.f32.mrb[0].mxu0
  %v986 = vadd.f32 %v833, %v985
  %v987 = vpop.f32.mrb[0].mxu0
  %v988 = vadd.f32 %v835, %v987
  %989 = vmatprep.mubr.bf16.mxu0 %v635
  %990 = vmatmul.mubr.bf16.gmra.mrb[0].mxu0 %v634
  %v991 = vpop.f32.mrb[0].mxu0
  %v992 = vadd.f32 %v839, %v991
  %v993 = vpop.f32.mrb[0].mxu0
  %v994 = vadd.f32 %v841, %v993
  %v995 = vpop.f32.mrb[0].mxu0
  %v996 = vadd.f32 %v843, %v995
  %v997 = vpop.f32.mrb[0].mxu0
  %v998 = vadd.f32 %v845, %v997
  %999 = vmatprep.mubr.bf16.mxu0 %v641
  %1000 = vmatmul.mubr.bf16.gmra.mrb[0].mxu0 %v640
  %v1001 = vpop.f32.mrb[0].mxu0
  %v1002 = vadd.f32 %v849, %v1001
  %v1003 = vpop.f32.mrb[0].mxu0
  %v1004 = vadd.f32 %v851, %v1003
  %v1005 = vpop.f32.mrb[0].mxu0
  %v1006 = vadd.f32 %v853, %v1005
  %v1007 = vpop.f32.mrb[0].mxu0
  %v1008 = vadd.f32 %v855, %v1007
  %1009 = vmatprep.mubr.bf16.mxu0 %v647
  %1010 = vmatmul.mubr.bf16.gmra.mrb[0].mxu0 %v646
  %v1011 = vpop.f32.mrb[0].mxu0
  %v1012 = vadd.f32 %v859, %v1011
  %v1013 = vpop.f32.mrb[0].mxu0
  %v1014 = vadd.f32 %v861, %v1013
  %v1015 = vpop.f32.mrb[0].mxu0
  %v1016 = vadd.f32 %v863, %v1015
  %v1017 = vpop.f32.mrb[0].mxu0
  %v1018 = vadd.f32 %v865, %v1017
  %1019 = vmatprep.mubr.bf16.mxu0 %v653
  %1020 = vmatmul.mubr.bf16.gmra.mrb[0].mxu0 %v652
  %v1021 = vpop.f32.mrb[0].mxu0
  %v1022 = vadd.f32 %v869, %v1021
  %v1023 = vpop.f32.mrb[0].mxu0
  %v1024 = vadd.f32 %v871, %v1023
  %v1025 = vpop.f32.mrb[0].mxu0
  %v1026 = vadd.f32 %v873, %v1025
  %v1027 = vpop.f32.mrb[0].mxu0
  %v1028 = vadd.f32 %v875, %v1027
  %1029 = vmatprep.mubr.bf16.mxu0 %v659
  %1030 = vmatmul.mubr.bf16.gmra.mrb[0].mxu0 %v658
  %v1031 = vpop.f32.mrb[0].mxu0
  %v1032 = vadd.f32 %v879, %v1031
  %v1033 = vpop.f32.mrb[0].mxu0
  %v1034 = vadd.f32 %v881, %v1033
  %v1035 = vpop.f32.mrb[0].mxu0
  %v1036 = vadd.f32 %v883, %v1035
  %v1037 = vpop.f32.mrb[0].mxu0
  %v1038 = vadd.f32 %v885, %v1037
  %1039 = vdwg.mxu0
  %1040 = vmatprep.subr.bf16.mxu0 %v271
  %1041 = vmatpush1.bf16.msra.mxu0 %v270
  %1042 = vmatprep.subr.bf16.mxu0 %v273
  %1043 = vmatpush1.bf16.msra.mxu0 %v272
  %1044 = vmatprep.subr.bf16.mxu0 %v275
  %1045 = vmatpush1.bf16.msra.mxu0 %v274
  %1046 = vmatprep.subr.bf16.mxu0 %v277
  %1047 = vmatpush1.bf16.msra.mxu0 %v276
  %1048 = vmatprep.subr.bf16.mxu0 %v279
  %1049 = vmatpush1.bf16.msra.mxu0 %v278
  %1050 = vmatprep.subr.bf16.mxu0 %v281
  %1051 = vmatpush1.bf16.msra.mxu0 %v280
  %1052 = vmatprep.subr.bf16.mxu0 %v283
  %1053 = vmatpush1.bf16.msra.mxu0 %v282
  %1054 = vmatprep.subr.bf16.mxu0 %v285
  %1055 = vmatpush1.bf16.msra.mxu0 %v284
  %1056 = vmatprep.subr.bf16.mxu0 %v287
  %1057 = vmatpush1.bf16.msra.mxu0 %v286
  %1058 = vmatprep.subr.bf16.mxu0 %v289
  %1059 = vmatpush1.bf16.msra.mxu0 %v288
  %1060 = vmatprep.subr.bf16.mxu0 %v291
  %1061 = vmatpush1.bf16.msra.mxu0 %v290
  %1062 = vmatprep.subr.bf16.mxu0 %v293
  %1063 = vmatpush1.bf16.msra.mxu0 %v292
  %1064 = vmatprep.subr.bf16.mxu0 %v295
  %1065 = vmatpush1.bf16.msra.mxu0 %v294
  %1066 = vmatprep.subr.bf16.mxu0 %v297
  %1067 = vmatpush1.bf16.msra.mxu0 %v296
  %1068 = vmatprep.subr.bf16.mxu0 %v299
  %1069 = vmatpush1.bf16.msra.mxu0 %v298
  %1070 = vmatprep.subr.bf16.mxu0 %v301
  %1071 = vmatpush1.bf16.msra.mxu0 %v300
  %1072 = vmatprep.mubr.bf16.mxu0 %v595
  %1073 = vmatmul.mubr.bf16.gmra.mrb[0].mxu0 %v594
  %v1074 = vpop.f32.mrb[0].mxu0
  %v1075 = vadd.f32 %v922, %v1074
  %v1076 = vpop.f32.mrb[0].mxu0
  %v1077 = vadd.f32 %v924, %v1076
  %v1078 = vpop.f32.mrb[0].mxu0
  %v1079 = vadd.f32 %v926, %v1078
  %v1080 = vpop.f32.mrb[0].mxu0
  %v1081 = vadd.f32 %v928, %v1080
  %1082 = vmatprep.mubr.bf16.mxu0 %v601
  %1083 = vmatmul.mubr.bf16.gmra.mrb[0].mxu0 %v600
  %v1084 = vpop.f32.mrb[0].mxu0
  %v1085 = vadd.f32 %v932, %v1084
  %v1086 = vpop.f32.mrb[0].mxu0
  %v1087 = vadd.f32 %v934, %v1086
  %v1088 = vpop.f32.mrb[0].mxu0
  %v1089 = vadd.f32 %v936, %v1088
  %v1090 = vpop.f32.mrb[0].mxu0
  %v1091 = vadd.f32 %v938, %v1090
  %1092 = vmatprep.mubr.bf16.mxu0 %v607
  %1093 = vmatmul.mubr.bf16.gmra.mrb[0].mxu0 %v606
  %v1094 = vpop.f32.mrb[0].mxu0
  %v1095 = vadd.f32 %v942, %v1094
  %v1096 = vpop.f32.mrb[0].mxu0
  %v1097 = vadd.f32 %v944, %v1096
  %v1098 = vpop.f32.mrb[0].mxu0
  %v1099 = vadd.f32 %v946, %v1098
  %v1100 = vpop.f32.mrb[0].mxu0
  %v1101 = vadd.f32 %v948, %v1100
  %1102 = vmatprep.mubr.bf16.mxu0 %v613
  %1103 = vmatmul.mubr.bf16.gmra.mrb[0].mxu0 %v612
  %v1104 = vpop.f32.mrb[0].mxu0
  %v1105 = vadd.f32 %v952, %v1104
  %v1106 = vpop.f32.mrb[0].mxu0
  %v1107 = vadd.f32 %v954, %v1106
  %v1108 = vpop.f32.mrb[0].mxu0
  %v1109 = vadd.f32 %v956, %v1108
  %v1110 = vpop.f32.mrb[0].mxu0
  %v1111 = vadd.f32 %v958, %v1110
  %1112 = vmatprep.mubr.bf16.mxu0 %v619
  %1113 = vmatmul.mubr.bf16.gmra.mrb[0].mxu0 %v618
  %v1114 = vpop.f32.mrb[0].mxu0
  %v1115 = vadd.f32 %v962, %v1114
  %v1116 = vpop.f32.mrb[0].mxu0
  %v1117 = vadd.f32 %v964, %v1116
  %v1118 = vpop.f32.mrb[0].mxu0
  %v1119 = vadd.f32 %v966, %v1118
  %v1120 = vpop.f32.mrb[0].mxu0
  %v1121 = vadd.f32 %v968, %v1120
  %1122 = vmatprep.mubr.bf16.mxu0 %v625
  %1123 = vmatmul.mubr.bf16.gmra.mrb[0].mxu0 %v624
  %v1124 = vpop.f32.mrb[0].mxu0
  %v1125 = vadd.f32 %v972, %v1124
  %v1126 = vpop.f32.mrb[0].mxu0
  %v1127 = vadd.f32 %v974, %v1126
  %v1128 = vpop.f32.mrb[0].mxu0
  %v1129 = vadd.f32 %v976, %v1128
  %v1130 = vpop.f32.mrb[0].mxu0
  %v1131 = vadd.f32 %v978, %v1130
  %1132 = vmatprep.mubr.bf16.mxu0 %v631
  %1133 = vmatmul.mubr.bf16.gmra.mrb[0].mxu0 %v630
  %v1134 = vpop.f32.mrb[0].mxu0
  %v1135 = vadd.f32 %v982, %v1134
  %v1136 = vpop.f32.mrb[0].mxu0
  %v1137 = vadd.f32 %v984, %v1136
  %v1138 = vpop.f32.mrb[0].mxu0
  %v1139 = vadd.f32 %v986, %v1138
  %v1140 = vpop.f32.mrb[0].mxu0
  %v1141 = vadd.f32 %v988, %v1140
  %1142 = vmatprep.mubr.bf16.mxu0 %v637
  %1143 = vmatmul.mubr.bf16.gmra.mrb[0].mxu0 %v636
  %v1144 = vpop.f32.mrb[0].mxu0
  %v1145 = vadd.f32 %v992, %v1144
  %v1146 = vpop.f32.mrb[0].mxu0
  %v1147 = vadd.f32 %v994, %v1146
  %v1148 = vpop.f32.mrb[0].mxu0
  %v1149 = vadd.f32 %v996, %v1148
  %v1150 = vpop.f32.mrb[0].mxu0
  %v1151 = vadd.f32 %v998, %v1150
  %1152 = vmatprep.mubr.bf16.mxu0 %v643
  %1153 = vmatmul.mubr.bf16.gmra.mrb[0].mxu0 %v642
  %v1154 = vpop.f32.mrb[0].mxu0
  %v1155 = vadd.f32 %v1002, %v1154
  %v1156 = vpop.f32.mrb[0].mxu0
  %v1157 = vadd.f32 %v1004, %v1156
  %v1158 = vpop.f32.mrb[0].mxu0
  %v1159 = vadd.f32 %v1006, %v1158
  %v1160 = vpop.f32.mrb[0].mxu0
  %v1161 = vadd.f32 %v1008, %v1160
  %1162 = vmatprep.mubr.bf16.mxu0 %v649
  %1163 = vmatmul.mubr.bf16.gmra.mrb[0].mxu0 %v648
  %v1164 = vpop.f32.mrb[0].mxu0
  %v1165 = vadd.f32 %v1012, %v1164
  %v1166 = vpop.f32.mrb[0].mxu0
  %v1167 = vadd.f32 %v1014, %v1166
  %v1168 = vpop.f32.mrb[0].mxu0
  %v1169 = vadd.f32 %v1016, %v1168
  %v1170 = vpop.f32.mrb[0].mxu0
  %v1171 = vadd.f32 %v1018, %v1170
  %1172 = vmatprep.mubr.bf16.mxu0 %v655
  %1173 = vmatmul.mubr.bf16.gmra.mrb[0].mxu0 %v654
  %v1174 = vpop.f32.mrb[0].mxu0
  %v1175 = vadd.f32 %v1022, %v1174
  %v1176 = vpop.f32.mrb[0].mxu0
  %v1177 = vadd.f32 %v1024, %v1176
  %v1178 = vpop.f32.mrb[0].mxu0
  %v1179 = vadd.f32 %v1026, %v1178
  %v1180 = vpop.f32.mrb[0].mxu0
  %v1181 = vadd.f32 %v1028, %v1180
  %1182 = vmatprep.mubr.bf16.mxu0 %v661
  %1183 = vmatmul.mubr.bf16.gmra.mrb[0].mxu0 %v660
  %v1184 = vpop.f32.mrb[0].mxu0
  %v1185 = vadd.f32 %v1032, %v1184
  %v1186 = vpop.f32.mrb[0].mxu0
  %v1187 = vadd.f32 %v1034, %v1186
  %v1188 = vpop.f32.mrb[0].mxu0
  %v1189 = vadd.f32 %v1036, %v1188
  %v1190 = vpop.f32.mrb[0].mxu0
  %v1191 = vadd.f32 %v1038, %v1190
  %1192 = vdwg.mxu0
  %vm1193 = vcmask 130048
  %v1194 = vsel %vm1193, %v1077, 0.0
  %v1195 = vadd.f32 %v1075, %v1194
  %1196 = vadd.xlane.f32.xlu0 %v1195
  %v1197 = vpop.xlane.xlu0 %1196
  %v1198 = vsel %vm1193, %v1081, 0.0
  %v1199 = vadd.f32 %v1079, %v1198
  %1200 = vadd.xlane.f32.xlu0 %v1199
  %v1201 = vpop.xlane.xlu0 %1200
  %v1202 = vsel %vm1193, %v1087, 0.0
  %v1203 = vadd.f32 %v1085, %v1202
  %1204 = vadd.xlane.f32.xlu0 %v1203
  %v1205 = vpop.xlane.xlu0 %1204
  %v1206 = vsel %vm1193, %v1091, 0.0
  %v1207 = vadd.f32 %v1089, %v1206
  %1208 = vadd.xlane.f32.xlu0 %v1207
  %v1209 = vpop.xlane.xlu0 %1208
  %v1210 = vsel %vm1193, %v1097, 0.0
  %v1211 = vadd.f32 %v1095, %v1210
  %1212 = vadd.xlane.f32.xlu0 %v1211
  %v1213 = vpop.xlane.xlu0 %1212
  %v1214 = vsel %vm1193, %v1101, 0.0
  %v1215 = vadd.f32 %v1099, %v1214
  %1216 = vadd.xlane.f32.xlu0 %v1215
  %v1217 = vpop.xlane.xlu0 %1216
  %v1218 = vsel %vm1193, %v1107, 0.0
  %v1219 = vadd.f32 %v1105, %v1218
  %1220 = vadd.xlane.f32.xlu0 %v1219
  %v1221 = vpop.xlane.xlu0 %1220
  %v1222 = vsel %vm1193, %v1111, 0.0
  %v1223 = vadd.f32 %v1109, %v1222
  %1224 = vadd.xlane.f32.xlu0 %v1223
  %v1225 = vpop.xlane.xlu0 %1224
  %v1226 = vsel %vm1193, %v1117, 0.0
  %v1227 = vadd.f32 %v1115, %v1226
  %1228 = vadd.xlane.f32.xlu0 %v1227
  %v1229 = vpop.xlane.xlu0 %1228
  %v1230 = vsel %vm1193, %v1121, 0.0
  %v1231 = vadd.f32 %v1119, %v1230
  %1232 = vadd.xlane.f32.xlu0 %v1231
  %v1233 = vpop.xlane.xlu0 %1232
  %v1234 = vsel %vm1193, %v1127, 0.0
  %v1235 = vadd.f32 %v1125, %v1234
  %1236 = vadd.xlane.f32.xlu0 %v1235
  %v1237 = vpop.xlane.xlu0 %1236
  %v1238 = vsel %vm1193, %v1131, 0.0
  %v1239 = vadd.f32 %v1129, %v1238
  %1240 = vadd.xlane.f32.xlu0 %v1239
  %v1241 = vpop.xlane.xlu0 %1240
  %v1242 = vsel %vm1193, %v1137, 0.0
  %v1243 = vadd.f32 %v1135, %v1242
  %1244 = vadd.xlane.f32.xlu0 %v1243
  %v1245 = vpop.xlane.xlu0 %1244
  %v1246 = vsel %vm1193, %v1141, 0.0
  %v1247 = vadd.f32 %v1139, %v1246
  %1248 = vadd.xlane.f32.xlu0 %v1247
  %v1249 = vpop.xlane.xlu0 %1248
  %v1250 = vsel %vm1193, %v1147, 0.0
  %v1251 = vadd.f32 %v1145, %v1250
  %1252 = vadd.xlane.f32.xlu0 %v1251
  %v1253 = vpop.xlane.xlu0 %1252
  %v1254 = vsel %vm1193, %v1151, 0.0
  %v1255 = vadd.f32 %v1149, %v1254
  %1256 = vadd.xlane.f32.xlu0 %v1255
  %v1257 = vpop.xlane.xlu0 %1256
  %v1258 = vsel %vm1193, %v1157, 0.0
  %v1259 = vadd.f32 %v1155, %v1258
  %1260 = vadd.xlane.f32.xlu0 %v1259
  %v1261 = vpop.xlane.xlu0 %1260
  %v1262 = vsel %vm1193, %v1161, 0.0
  %v1263 = vadd.f32 %v1159, %v1262
  %1264 = vadd.xlane.f32.xlu0 %v1263
  %v1265 = vpop.xlane.xlu0 %1264
  %v1266 = vsel %vm1193, %v1167, 0.0
  %v1267 = vadd.f32 %v1165, %v1266
  %1268 = vadd.xlane.f32.xlu0 %v1267
  %v1269 = vpop.xlane.xlu0 %1268
  %v1270 = vsel %vm1193, %v1171, 0.0
  %v1271 = vadd.f32 %v1169, %v1270
  %1272 = vadd.xlane.f32.xlu0 %v1271
  %v1273 = vpop.xlane.xlu0 %1272
  %v1274 = vsel %vm1193, %v1177, 0.0
  %v1275 = vadd.f32 %v1175, %v1274
  %1276 = vadd.xlane.f32.xlu0 %v1275
  %v1277 = vpop.xlane.xlu0 %1276
  %v1278 = vsel %vm1193, %v1181, 0.0
  %v1279 = vadd.f32 %v1179, %v1278
  %1280 = vadd.xlane.f32.xlu0 %v1279
  %v1281 = vpop.xlane.xlu0 %1280
  %v1282 = vsel %vm1193, %v1187, 0.0
  %v1283 = vadd.f32 %v1185, %v1282
  %1284 = vadd.xlane.f32.xlu0 %v1283
  %v1285 = vpop.xlane.xlu0 %1284
  %v1286 = vsel %vm1193, %v1191, 0.0
  %v1287 = vadd.f32 %v1189, %v1286
  %1288 = vadd.xlane.f32.xlu0 %v1287
  %v1289 = vpop.xlane.xlu0 %1288
  %v1290 = vmul.f32 %v1197, 0.0069444445
  %v1291 = vmul.f32 %v1201, 0.0069444445
  %v1292 = vmul.f32 %v1205, 0.0069444445
  %v1293 = vmul.f32 %v1209, 0.0069444445
  %v1294 = vmul.f32 %v1213, 0.0069444445
  %v1295 = vmul.f32 %v1217, 0.0069444445
  %v1296 = vmul.f32 %v1221, 0.0069444445
  %v1297 = vmul.f32 %v1225, 0.0069444445
  %v1298 = vmul.f32 %v1229, 0.0069444445
  %v1299 = vmul.f32 %v1233, 0.0069444445
  %v1300 = vmul.f32 %v1237, 0.0069444445
  %v1301 = vmul.f32 %v1241, 0.0069444445
  %v1302 = vmul.f32 %v1245, 0.0069444445
  %v1303 = vmul.f32 %v1249, 0.0069444445
  %v1304 = vmul.f32 %v1253, 0.0069444445
  %v1305 = vmul.f32 %v1257, 0.0069444445
  %v1306 = vmul.f32 %v1261, 0.0069444445
  %v1307 = vmul.f32 %v1265, 0.0069444445
  %v1308 = vmul.f32 %v1269, 0.0069444445
  %v1309 = vmul.f32 %v1273, 0.0069444445
  %v1310 = vmul.f32 %v1277, 0.0069444445
  %v1311 = vmul.f32 %v1281, 0.0069444445
  %v1312 = vmul.f32 %v1285, 0.0069444445
  %v1313 = vmul.f32 %v1289, 0.0069444445
  %v1314 = vsub.f32 %v1075, %v1290
  %v1315 = vsub.f32 %v1077, %v1290
  %v1316 = vsub.f32 %v1079, %v1291
  %v1317 = vsub.f32 %v1081, %v1291
  %v1318 = vsub.f32 %v1085, %v1292
  %v1319 = vsub.f32 %v1087, %v1292
  %v1320 = vsub.f32 %v1089, %v1293
  %v1321 = vsub.f32 %v1091, %v1293
  %v1322 = vsub.f32 %v1095, %v1294
  %v1323 = vsub.f32 %v1097, %v1294
  %v1324 = vsub.f32 %v1099, %v1295
  %v1325 = vsub.f32 %v1101, %v1295
  %v1326 = vsub.f32 %v1105, %v1296
  %v1327 = vsub.f32 %v1107, %v1296
  %v1328 = vsub.f32 %v1109, %v1297
  %v1329 = vsub.f32 %v1111, %v1297
  %v1330 = vsub.f32 %v1115, %v1298
  %v1331 = vsub.f32 %v1117, %v1298
  %v1332 = vsub.f32 %v1119, %v1299
  %v1333 = vsub.f32 %v1121, %v1299
  %v1334 = vsub.f32 %v1125, %v1300
  %v1335 = vsub.f32 %v1127, %v1300
  %v1336 = vsub.f32 %v1129, %v1301
  %v1337 = vsub.f32 %v1131, %v1301
  %v1338 = vsub.f32 %v1135, %v1302
  %v1339 = vsub.f32 %v1137, %v1302
  %v1340 = vsub.f32 %v1139, %v1303
  %v1341 = vsub.f32 %v1141, %v1303
  %v1342 = vsub.f32 %v1145, %v1304
  %v1343 = vsub.f32 %v1147, %v1304
  %v1344 = vsub.f32 %v1149, %v1305
  %v1345 = vsub.f32 %v1151, %v1305
  %v1346 = vsub.f32 %v1155, %v1306
  %v1347 = vsub.f32 %v1157, %v1306
  %v1348 = vsub.f32 %v1159, %v1307
  %v1349 = vsub.f32 %v1161, %v1307
  %v1350 = vsub.f32 %v1165, %v1308
  %v1351 = vsub.f32 %v1167, %v1308
  %v1352 = vsub.f32 %v1169, %v1309
  %v1353 = vsub.f32 %v1171, %v1309
  %v1354 = vsub.f32 %v1175, %v1310
  %v1355 = vsub.f32 %v1177, %v1310
  %v1356 = vsub.f32 %v1179, %v1311
  %v1357 = vsub.f32 %v1181, %v1311
  %v1358 = vsub.f32 %v1185, %v1312
  %v1359 = vsub.f32 %v1187, %v1312
  %v1360 = vsub.f32 %v1189, %v1313
  %v1361 = vsub.f32 %v1191, %v1313
  %v1362 = vmul.f32 %v1314, %v1314
  %v1363 = vmul.f32 %v1315, %v1315
  %v1364 = vmul.f32 %v1316, %v1316
  %v1365 = vmul.f32 %v1317, %v1317
  %v1366 = vmul.f32 %v1318, %v1318
  %v1367 = vmul.f32 %v1319, %v1319
  %v1368 = vmul.f32 %v1320, %v1320
  %v1369 = vmul.f32 %v1321, %v1321
  %v1370 = vmul.f32 %v1322, %v1322
  %v1371 = vmul.f32 %v1323, %v1323
  %v1372 = vmul.f32 %v1324, %v1324
  %v1373 = vmul.f32 %v1325, %v1325
  %v1374 = vmul.f32 %v1326, %v1326
  %v1375 = vmul.f32 %v1327, %v1327
  %v1376 = vmul.f32 %v1328, %v1328
  %v1377 = vmul.f32 %v1329, %v1329
  %v1378 = vmul.f32 %v1330, %v1330
  %v1379 = vmul.f32 %v1331, %v1331
  %v1380 = vmul.f32 %v1332, %v1332
  %v1381 = vmul.f32 %v1333, %v1333
  %v1382 = vmul.f32 %v1334, %v1334
  %v1383 = vmul.f32 %v1335, %v1335
  %v1384 = vmul.f32 %v1336, %v1336
  %v1385 = vmul.f32 %v1337, %v1337
  %v1386 = vmul.f32 %v1338, %v1338
  %v1387 = vmul.f32 %v1339, %v1339
  %v1388 = vmul.f32 %v1340, %v1340
  %v1389 = vmul.f32 %v1341, %v1341
  %v1390 = vmul.f32 %v1342, %v1342
  %v1391 = vmul.f32 %v1343, %v1343
  %v1392 = vmul.f32 %v1344, %v1344
  %v1393 = vmul.f32 %v1345, %v1345
  %v1394 = vmul.f32 %v1346, %v1346
  %v1395 = vmul.f32 %v1347, %v1347
  %v1396 = vmul.f32 %v1348, %v1348
  %v1397 = vmul.f32 %v1349, %v1349
  %v1398 = vmul.f32 %v1350, %v1350
  %v1399 = vmul.f32 %v1351, %v1351
  %v1400 = vmul.f32 %v1352, %v1352
  %v1401 = vmul.f32 %v1353, %v1353
  %v1402 = vmul.f32 %v1354, %v1354
  %v1403 = vmul.f32 %v1355, %v1355
  %v1404 = vmul.f32 %v1356, %v1356
  %v1405 = vmul.f32 %v1357, %v1357
  %v1406 = vmul.f32 %v1358, %v1358
  %v1407 = vmul.f32 %v1359, %v1359
  %v1408 = vmul.f32 %v1360, %v1360
  %v1409 = vmul.f32 %v1361, %v1361
  %v1410 = vsel %vm1193, %v1363, 0.0
  %v1411 = vadd.f32 %v1362, %v1410
  %1412 = vadd.xlane.f32.xlu0 %v1411
  %v1413 = vpop.xlane.xlu0 %1412
  %v1414 = vsel %vm1193, %v1365, 0.0
  %v1415 = vadd.f32 %v1364, %v1414
  %1416 = vadd.xlane.f32.xlu0 %v1415
  %v1417 = vpop.xlane.xlu0 %1416
  %v1418 = vsel %vm1193, %v1367, 0.0
  %v1419 = vadd.f32 %v1366, %v1418
  %1420 = vadd.xlane.f32.xlu0 %v1419
  %v1421 = vpop.xlane.xlu0 %1420
  %v1422 = vsel %vm1193, %v1369, 0.0
  %v1423 = vadd.f32 %v1368, %v1422
  %1424 = vadd.xlane.f32.xlu0 %v1423
  %v1425 = vpop.xlane.xlu0 %1424
  %v1426 = vsel %vm1193, %v1371, 0.0
  %v1427 = vadd.f32 %v1370, %v1426
  %1428 = vadd.xlane.f32.xlu0 %v1427
  %v1429 = vpop.xlane.xlu0 %1428
  %v1430 = vsel %vm1193, %v1373, 0.0
  %v1431 = vadd.f32 %v1372, %v1430
  %1432 = vadd.xlane.f32.xlu0 %v1431
  %v1433 = vpop.xlane.xlu0 %1432
  %v1434 = vsel %vm1193, %v1375, 0.0
  %v1435 = vadd.f32 %v1374, %v1434
  %1436 = vadd.xlane.f32.xlu0 %v1435
  %v1437 = vpop.xlane.xlu0 %1436
  %v1438 = vsel %vm1193, %v1377, 0.0
  %v1439 = vadd.f32 %v1376, %v1438
  %1440 = vadd.xlane.f32.xlu0 %v1439
  %v1441 = vpop.xlane.xlu0 %1440
  %v1442 = vsel %vm1193, %v1379, 0.0
  %v1443 = vadd.f32 %v1378, %v1442
  %1444 = vadd.xlane.f32.xlu0 %v1443
  %v1445 = vpop.xlane.xlu0 %1444
  %v1446 = vsel %vm1193, %v1381, 0.0
  %v1447 = vadd.f32 %v1380, %v1446
  %1448 = vadd.xlane.f32.xlu0 %v1447
  %v1449 = vpop.xlane.xlu0 %1448
  %v1450 = vsel %vm1193, %v1383, 0.0
  %v1451 = vadd.f32 %v1382, %v1450
  %1452 = vadd.xlane.f32.xlu0 %v1451
  %v1453 = vpop.xlane.xlu0 %1452
  %v1454 = vsel %vm1193, %v1385, 0.0
  %v1455 = vadd.f32 %v1384, %v1454
  %1456 = vadd.xlane.f32.xlu0 %v1455
  %v1457 = vpop.xlane.xlu0 %1456
  %v1458 = vsel %vm1193, %v1387, 0.0
  %v1459 = vadd.f32 %v1386, %v1458
  %1460 = vadd.xlane.f32.xlu0 %v1459
  %v1461 = vpop.xlane.xlu0 %1460
  %v1462 = vsel %vm1193, %v1389, 0.0
  %v1463 = vadd.f32 %v1388, %v1462
  %1464 = vadd.xlane.f32.xlu0 %v1463
  %v1465 = vpop.xlane.xlu0 %1464
  %v1466 = vsel %vm1193, %v1391, 0.0
  %v1467 = vadd.f32 %v1390, %v1466
  %1468 = vadd.xlane.f32.xlu0 %v1467
  %v1469 = vpop.xlane.xlu0 %1468
  %v1470 = vsel %vm1193, %v1393, 0.0
  %v1471 = vadd.f32 %v1392, %v1470
  %1472 = vadd.xlane.f32.xlu0 %v1471
  %v1473 = vpop.xlane.xlu0 %1472
  %v1474 = vsel %vm1193, %v1395, 0.0
  %v1475 = vadd.f32 %v1394, %v1474
  %1476 = vadd.xlane.f32.xlu0 %v1475
  %v1477 = vpop.xlane.xlu0 %1476
  %v1478 = vsel %vm1193, %v1397, 0.0
  %v1479 = vadd.f32 %v1396, %v1478
  %1480 = vadd.xlane.f32.xlu0 %v1479
  %v1481 = vpop.xlane.xlu0 %1480
  %v1482 = vsel %vm1193, %v1399, 0.0
  %v1483 = vadd.f32 %v1398, %v1482
  %1484 = vadd.xlane.f32.xlu0 %v1483
  %v1485 = vpop.xlane.xlu0 %1484
  %v1486 = vsel %vm1193, %v1401, 0.0
  %v1487 = vadd.f32 %v1400, %v1486
  %1488 = vadd.xlane.f32.xlu0 %v1487
  %v1489 = vpop.xlane.xlu0 %1488
  %v1490 = vsel %vm1193, %v1403, 0.0
  %v1491 = vadd.f32 %v1402, %v1490
  %1492 = vadd.xlane.f32.xlu0 %v1491
  %v1493 = vpop.xlane.xlu0 %1492
  %v1494 = vsel %vm1193, %v1405, 0.0
  %v1495 = vadd.f32 %v1404, %v1494
  %1496 = vadd.xlane.f32.xlu0 %v1495
  %v1497 = vpop.xlane.xlu0 %1496
  %v1498 = vsel %vm1193, %v1407, 0.0
  %v1499 = vadd.f32 %v1406, %v1498
  %1500 = vadd.xlane.f32.xlu0 %v1499
  %v1501 = vpop.xlane.xlu0 %1500
  %v1502 = vsel %vm1193, %v1409, 0.0
  %v1503 = vadd.f32 %v1408, %v1502
  %1504 = vadd.xlane.f32.xlu0 %v1503
  %v1505 = vpop.xlane.xlu0 %1504
  %v1506 = vmul.f32 %v1413, 0.0069444445
  %v1507 = vmul.f32 %v1417, 0.0069444445
  %v1508 = vmul.f32 %v1421, 0.0069444445
  %v1509 = vmul.f32 %v1425, 0.0069444445
  %v1510 = vmul.f32 %v1429, 0.0069444445
  %v1511 = vmul.f32 %v1433, 0.0069444445
  %v1512 = vmul.f32 %v1437, 0.0069444445
  %v1513 = vmul.f32 %v1441, 0.0069444445
  %v1514 = vmul.f32 %v1445, 0.0069444445
  %v1515 = vmul.f32 %v1449, 0.0069444445
  %v1516 = vmul.f32 %v1453, 0.0069444445
  %v1517 = vmul.f32 %v1457, 0.0069444445
  %v1518 = vmul.f32 %v1461, 0.0069444445
  %v1519 = vmul.f32 %v1465, 0.0069444445
  %v1520 = vmul.f32 %v1469, 0.0069444445
  %v1521 = vmul.f32 %v1473, 0.0069444445
  %v1522 = vmul.f32 %v1477, 0.0069444445
  %v1523 = vmul.f32 %v1481, 0.0069444445
  %v1524 = vmul.f32 %v1485, 0.0069444445
  %v1525 = vmul.f32 %v1489, 0.0069444445
  %v1526 = vmul.f32 %v1493, 0.0069444445
  %v1527 = vmul.f32 %v1497, 0.0069444445
  %v1528 = vmul.f32 %v1501, 0.0069444445
  %v1529 = vmul.f32 %v1505, 0.0069444445
  %v1530 = vadd.f32 %v1506, 0.001
  %v1531 = vadd.f32 %v1507, 0.001
  %v1532 = vadd.f32 %v1508, 0.001
  %v1533 = vadd.f32 %v1509, 0.001
  %v1534 = vadd.f32 %v1510, 0.001
  %v1535 = vadd.f32 %v1511, 0.001
  %v1536 = vadd.f32 %v1512, 0.001
  %v1537 = vadd.f32 %v1513, 0.001
  %v1538 = vadd.f32 %v1514, 0.001
  %v1539 = vadd.f32 %v1515, 0.001
  %v1540 = vadd.f32 %v1516, 0.001
  %v1541 = vadd.f32 %v1517, 0.001
  %v1542 = vadd.f32 %v1518, 0.001
  %v1543 = vadd.f32 %v1519, 0.001
  %v1544 = vadd.f32 %v1520, 0.001
  %v1545 = vadd.f32 %v1521, 0.001
  %v1546 = vadd.f32 %v1522, 0.001
  %v1547 = vadd.f32 %v1523, 0.001
  %v1548 = vadd.f32 %v1524, 0.001
  %v1549 = vadd.f32 %v1525, 0.001
  %v1550 = vadd.f32 %v1526, 0.001
  %v1551 = vadd.f32 %v1527, 0.001
  %v1552 = vadd.f32 %v1528, 0.001
  %v1553 = vadd.f32 %v1529, 0.001
  %v1554 = vrsqrt.pop %v1530
  %v1555 = vrsqrt.pop %v1531
  %v1556 = vrsqrt.pop %v1532
  %v1557 = vrsqrt.pop %v1533
  %v1558 = vrsqrt.pop %v1534
  %v1559 = vrsqrt.pop %v1535
  %v1560 = vrsqrt.pop %v1536
  %v1561 = vrsqrt.pop %v1537
  %v1562 = vrsqrt.pop %v1538
  %v1563 = vrsqrt.pop %v1539
  %v1564 = vrsqrt.pop %v1540
  %v1565 = vrsqrt.pop %v1541
  %v1566 = vrsqrt.pop %v1542
  %v1567 = vrsqrt.pop %v1543
  %v1568 = vrsqrt.pop %v1544
  %v1569 = vrsqrt.pop %v1545
  %v1570 = vrsqrt.pop %v1546
  %v1571 = vrsqrt.pop %v1547
  %v1572 = vrsqrt.pop %v1548
  %v1573 = vrsqrt.pop %v1549
  %v1574 = vrsqrt.pop %v1550
  %v1575 = vrsqrt.pop %v1551
  %v1576 = vrsqrt.pop %v1552
  %v1577 = vrsqrt.pop %v1553
  %v1578 = vld [vmem:[%s2] sm:$0xff]
  %v1579 = vld [vmem:[%s2 + $0x8] sm:$0xff]
  %v1580 = vld [vmem:[%s2 + $0x10] sm:$0xff]
  %v1581 = vld [vmem:[%s2 + $0x18] sm:$0xff]
  %v1582 = vld [vmem:[%s2 + $0x20] sm:$0xff]
  %v1583 = vld [vmem:[%s2 + $0x28] sm:$0xff]
  %v1584 = vld [vmem:[%s2 + $0x30] sm:$0xff]
  %v1585 = vld [vmem:[%s2 + $0x38] sm:$0xff]
  %v1586 = vld [vmem:[%s2 + $0x40] sm:$0xff]
  %v1587 = vld [vmem:[%s2 + $0x48] sm:$0xff]
  %v1588 = vld [vmem:[%s2 + $0x50] sm:$0xff]
  %v1589 = vld [vmem:[%s2 + $0x58] sm:$0xff]
  %v1590 = vld [vmem:[%s2 + $0x60] sm:$0xff]
  %v1591 = vld [vmem:[%s2 + $0x68] sm:$0xff]
  %v1592 = vld [vmem:[%s2 + $0x70] sm:$0xff]
  %v1593 = vld [vmem:[%s2 + $0x78] sm:$0xff]
  %v1594 = vld [vmem:[%s2 + $0x80] sm:$0xff]
  %v1595 = vld [vmem:[%s2 + $0x88] sm:$0xff]
  %v1596 = vld [vmem:[%s2 + $0x90] sm:$0xff]
  %v1597 = vld [vmem:[%s2 + $0x98] sm:$0xff]
  %v1598 = vld [vmem:[%s2 + $0xa0] sm:$0xff]
  %v1599 = vld [vmem:[%s2 + $0xa8] sm:$0xff]
  %v1600 = vld [vmem:[%s2 + $0xb0] sm:$0xff]
  %v1601 = vld [vmem:[%s2 + $0xb8] sm:$0xff]
  %v1602 = vmul.f32 %v1578, %v1554
  %v1603 = vmul.f32 %v1579, %v1555
  %v1604 = vmul.f32 %v1580, %v1556
  %v1605 = vmul.f32 %v1581, %v1557
  %v1606 = vmul.f32 %v1582, %v1558
  %v1607 = vmul.f32 %v1583, %v1559
  %v1608 = vmul.f32 %v1584, %v1560
  %v1609 = vmul.f32 %v1585, %v1561
  %v1610 = vmul.f32 %v1586, %v1562
  %v1611 = vmul.f32 %v1587, %v1563
  %v1612 = vmul.f32 %v1588, %v1564
  %v1613 = vmul.f32 %v1589, %v1565
  %v1614 = vmul.f32 %v1590, %v1566
  %v1615 = vmul.f32 %v1591, %v1567
  %v1616 = vmul.f32 %v1592, %v1568
  %v1617 = vmul.f32 %v1593, %v1569
  %v1618 = vmul.f32 %v1594, %v1570
  %v1619 = vmul.f32 %v1595, %v1571
  %v1620 = vmul.f32 %v1596, %v1572
  %v1621 = vmul.f32 %v1597, %v1573
  %v1622 = vmul.f32 %v1598, %v1574
  %v1623 = vmul.f32 %v1599, %v1575
  %v1624 = vmul.f32 %v1600, %v1576
  %v1625 = vmul.f32 %v1601, %v1577
  %1627 = vset.pattern.permute.xlu0 0
  %1628 = vperm.xlu0 %1627, %v1602
  %v1629 = vpop.permute.xlu0 %1628
  %1632 = vset.pattern.permute.xlu0 0
  %1633 = vperm.xlu0 %1632, %v1603
  %v1634 = vpop.permute.xlu0 %1633
  %1637 = vset.pattern.permute.xlu0 0
  %1638 = vperm.xlu0 %1637, %v1604
  %v1639 = vpop.permute.xlu0 %1638
  %1642 = vset.pattern.permute.xlu0 0
  %1643 = vperm.xlu0 %1642, %v1605
  %v1644 = vpop.permute.xlu0 %1643
  %1647 = vset.pattern.permute.xlu0 0
  %1648 = vperm.xlu0 %1647, %v1606
  %v1649 = vpop.permute.xlu0 %1648
  %1652 = vset.pattern.permute.xlu0 0
  %1653 = vperm.xlu0 %1652, %v1607
  %v1654 = vpop.permute.xlu0 %1653
  %1657 = vset.pattern.permute.xlu0 0
  %1658 = vperm.xlu0 %1657, %v1608
  %v1659 = vpop.permute.xlu0 %1658
  %1662 = vset.pattern.permute.xlu0 0
  %1663 = vperm.xlu0 %1662, %v1609
  %v1664 = vpop.permute.xlu0 %1663
  %1667 = vset.pattern.permute.xlu0 0
  %1668 = vperm.xlu0 %1667, %v1610
  %v1669 = vpop.permute.xlu0 %1668
  %1672 = vset.pattern.permute.xlu0 0
  %1673 = vperm.xlu0 %1672, %v1611
  %v1674 = vpop.permute.xlu0 %1673
  %1677 = vset.pattern.permute.xlu0 0
  %1678 = vperm.xlu0 %1677, %v1612
  %v1679 = vpop.permute.xlu0 %1678
  %1682 = vset.pattern.permute.xlu0 0
  %1683 = vperm.xlu0 %1682, %v1613
  %v1684 = vpop.permute.xlu0 %1683
  %1687 = vset.pattern.permute.xlu0 0
  %1688 = vperm.xlu0 %1687, %v1614
  %v1689 = vpop.permute.xlu0 %1688
  %1692 = vset.pattern.permute.xlu0 0
  %1693 = vperm.xlu0 %1692, %v1615
  %v1694 = vpop.permute.xlu0 %1693
  %1697 = vset.pattern.permute.xlu0 0
  %1698 = vperm.xlu0 %1697, %v1616
  %v1699 = vpop.permute.xlu0 %1698
  %1702 = vset.pattern.permute.xlu0 0
  %1703 = vperm.xlu0 %1702, %v1617
  %v1704 = vpop.permute.xlu0 %1703
  %1707 = vset.pattern.permute.xlu0 0
  %1708 = vperm.xlu0 %1707, %v1618
  %v1709 = vpop.permute.xlu0 %1708
  %1712 = vset.pattern.permute.xlu0 0
  %1713 = vperm.xlu0 %1712, %v1619
  %v1714 = vpop.permute.xlu0 %1713
  %1717 = vset.pattern.permute.xlu0 0
  %1718 = vperm.xlu0 %1717, %v1620
  %v1719 = vpop.permute.xlu0 %1718
  %1722 = vset.pattern.permute.xlu0 0
  %1723 = vperm.xlu0 %1722, %v1621
  %v1724 = vpop.permute.xlu0 %1723
  %1727 = vset.pattern.permute.xlu0 0
  %1728 = vperm.xlu0 %1727, %v1622
  %v1729 = vpop.permute.xlu0 %1728
  %1732 = vset.pattern.permute.xlu0 0
  %1733 = vperm.xlu0 %1732, %v1623
  %v1734 = vpop.permute.xlu0 %1733
  %1737 = vset.pattern.permute.xlu0 0
  %1738 = vperm.xlu0 %1737, %v1624
  %v1739 = vpop.permute.xlu0 %1738
  %1742 = vset.pattern.permute.xlu0 0
  %1743 = vperm.xlu0 %1742, %v1625
  %v1744 = vpop.permute.xlu0 %1743
  %v1746 = vmul.f32 %v1314, %v1629
  %v1747 = vmul.f32 %v1315, %v1629
  %v1748 = vmul.f32 %v1316, %v1634
  %v1749 = vmul.f32 %v1317, %v1634
  %v1750 = vmul.f32 %v1318, %v1639
  %v1751 = vmul.f32 %v1319, %v1639
  %v1752 = vmul.f32 %v1320, %v1644
  %v1753 = vmul.f32 %v1321, %v1644
  %v1754 = vmul.f32 %v1322, %v1649
  %v1755 = vmul.f32 %v1323, %v1649
  %v1756 = vmul.f32 %v1324, %v1654
  %v1757 = vmul.f32 %v1325, %v1654
  %v1758 = vmul.f32 %v1326, %v1659
  %v1759 = vmul.f32 %v1327, %v1659
  %v1760 = vmul.f32 %v1328, %v1664
  %v1761 = vmul.f32 %v1329, %v1664
  %v1762 = vmul.f32 %v1330, %v1669
  %v1763 = vmul.f32 %v1331, %v1669
  %v1764 = vmul.f32 %v1332, %v1674
  %v1765 = vmul.f32 %v1333, %v1674
  %v1766 = vmul.f32 %v1334, %v1679
  %v1767 = vmul.f32 %v1335, %v1679
  %v1768 = vmul.f32 %v1336, %v1684
  %v1769 = vmul.f32 %v1337, %v1684
  %v1770 = vmul.f32 %v1338, %v1689
  %v1771 = vmul.f32 %v1339, %v1689
  %v1772 = vmul.f32 %v1340, %v1694
  %v1773 = vmul.f32 %v1341, %v1694
  %v1774 = vmul.f32 %v1342, %v1699
  %v1775 = vmul.f32 %v1343, %v1699
  %v1776 = vmul.f32 %v1344, %v1704
  %v1777 = vmul.f32 %v1345, %v1704
  %v1778 = vmul.f32 %v1346, %v1709
  %v1779 = vmul.f32 %v1347, %v1709
  %v1780 = vmul.f32 %v1348, %v1714
  %v1781 = vmul.f32 %v1349, %v1714
  %v1782 = vmul.f32 %v1350, %v1719
  %v1783 = vmul.f32 %v1351, %v1719
  %v1784 = vmul.f32 %v1352, %v1724
  %v1785 = vmul.f32 %v1353, %v1724
  %v1786 = vmul.f32 %v1354, %v1729
  %v1787 = vmul.f32 %v1355, %v1729
  %v1788 = vmul.f32 %v1356, %v1734
  %v1789 = vmul.f32 %v1357, %v1734
  %v1790 = vmul.f32 %v1358, %v1739
  %v1791 = vmul.f32 %v1359, %v1739
  %v1792 = vmul.f32 %v1360, %v1744
  %v1793 = vmul.f32 %v1361, %v1744
  %1795 = vset.pattern.permute.xlu0 1
  %1796 = vperm.xlu0 %1795, %v1578
  %v1797 = vpop.permute.xlu0 %1796
  %1800 = vset.pattern.permute.xlu0 1
  %1801 = vperm.xlu0 %1800, %v1579
  %v1802 = vpop.permute.xlu0 %1801
  %1805 = vset.pattern.permute.xlu0 1
  %1806 = vperm.xlu0 %1805, %v1580
  %v1807 = vpop.permute.xlu0 %1806
  %1810 = vset.pattern.permute.xlu0 1
  %1811 = vperm.xlu0 %1810, %v1581
  %v1812 = vpop.permute.xlu0 %1811
  %1815 = vset.pattern.permute.xlu0 1
  %1816 = vperm.xlu0 %1815, %v1582
  %v1817 = vpop.permute.xlu0 %1816
  %1820 = vset.pattern.permute.xlu0 1
  %1821 = vperm.xlu0 %1820, %v1583
  %v1822 = vpop.permute.xlu0 %1821
  %1825 = vset.pattern.permute.xlu0 1
  %1826 = vperm.xlu0 %1825, %v1584
  %v1827 = vpop.permute.xlu0 %1826
  %1830 = vset.pattern.permute.xlu0 1
  %1831 = vperm.xlu0 %1830, %v1585
  %v1832 = vpop.permute.xlu0 %1831
  %1835 = vset.pattern.permute.xlu0 1
  %1836 = vperm.xlu0 %1835, %v1586
  %v1837 = vpop.permute.xlu0 %1836
  %1840 = vset.pattern.permute.xlu0 1
  %1841 = vperm.xlu0 %1840, %v1587
  %v1842 = vpop.permute.xlu0 %1841
  %1845 = vset.pattern.permute.xlu0 1
  %1846 = vperm.xlu0 %1845, %v1588
  %v1847 = vpop.permute.xlu0 %1846
  %1850 = vset.pattern.permute.xlu0 1
  %1851 = vperm.xlu0 %1850, %v1589
  %v1852 = vpop.permute.xlu0 %1851
  %1855 = vset.pattern.permute.xlu0 1
  %1856 = vperm.xlu0 %1855, %v1590
  %v1857 = vpop.permute.xlu0 %1856
  %1860 = vset.pattern.permute.xlu0 1
  %1861 = vperm.xlu0 %1860, %v1591
  %v1862 = vpop.permute.xlu0 %1861
  %1865 = vset.pattern.permute.xlu0 1
  %1866 = vperm.xlu0 %1865, %v1592
  %v1867 = vpop.permute.xlu0 %1866
  %1870 = vset.pattern.permute.xlu0 1
  %1871 = vperm.xlu0 %1870, %v1593
  %v1872 = vpop.permute.xlu0 %1871
  %1875 = vset.pattern.permute.xlu0 1
  %1876 = vperm.xlu0 %1875, %v1594
  %v1877 = vpop.permute.xlu0 %1876
  %1880 = vset.pattern.permute.xlu0 1
  %1881 = vperm.xlu0 %1880, %v1595
  %v1882 = vpop.permute.xlu0 %1881
  %1885 = vset.pattern.permute.xlu0 1
  %1886 = vperm.xlu0 %1885, %v1596
  %v1887 = vpop.permute.xlu0 %1886
  %1890 = vset.pattern.permute.xlu0 1
  %1891 = vperm.xlu0 %1890, %v1597
  %v1892 = vpop.permute.xlu0 %1891
  %1895 = vset.pattern.permute.xlu0 1
  %1896 = vperm.xlu0 %1895, %v1598
  %v1897 = vpop.permute.xlu0 %1896
  %1900 = vset.pattern.permute.xlu0 1
  %1901 = vperm.xlu0 %1900, %v1599
  %v1902 = vpop.permute.xlu0 %1901
  %1905 = vset.pattern.permute.xlu0 1
  %1906 = vperm.xlu0 %1905, %v1600
  %v1907 = vpop.permute.xlu0 %1906
  %1910 = vset.pattern.permute.xlu0 1
  %1911 = vperm.xlu0 %1910, %v1601
  %v1912 = vpop.permute.xlu0 %1911
  %v1914 = vadd.f32 %v1746, %v1797
  %v1915 = vadd.f32 %v1747, %v1797
  %v1916 = vadd.f32 %v1748, %v1802
  %v1917 = vadd.f32 %v1749, %v1802
  %v1918 = vadd.f32 %v1750, %v1807
  %v1919 = vadd.f32 %v1751, %v1807
  %v1920 = vadd.f32 %v1752, %v1812
  %v1921 = vadd.f32 %v1753, %v1812
  %v1922 = vadd.f32 %v1754, %v1817
  %v1923 = vadd.f32 %v1755, %v1817
  %v1924 = vadd.f32 %v1756, %v1822
  %v1925 = vadd.f32 %v1757, %v1822
  %v1926 = vadd.f32 %v1758, %v1827
  %v1927 = vadd.f32 %v1759, %v1827
  %v1928 = vadd.f32 %v1760, %v1832
  %v1929 = vadd.f32 %v1761, %v1832
  %v1930 = vadd.f32 %v1762, %v1837
  %v1931 = vadd.f32 %v1763, %v1837
  %v1932 = vadd.f32 %v1764, %v1842
  %v1933 = vadd.f32 %v1765, %v1842
  %v1934 = vadd.f32 %v1766, %v1847
  %v1935 = vadd.f32 %v1767, %v1847
  %v1936 = vadd.f32 %v1768, %v1852
  %v1937 = vadd.f32 %v1769, %v1852
  %v1938 = vadd.f32 %v1770, %v1857
  %v1939 = vadd.f32 %v1771, %v1857
  %v1940 = vadd.f32 %v1772, %v1862
  %v1941 = vadd.f32 %v1773, %v1862
  %v1942 = vadd.f32 %v1774, %v1867
  %v1943 = vadd.f32 %v1775, %v1867
  %v1944 = vadd.f32 %v1776, %v1872
  %v1945 = vadd.f32 %v1777, %v1872
  %v1946 = vadd.f32 %v1778, %v1877
  %v1947 = vadd.f32 %v1779, %v1877
  %v1948 = vadd.f32 %v1780, %v1882
  %v1949 = vadd.f32 %v1781, %v1882
  %v1950 = vadd.f32 %v1782, %v1887
  %v1951 = vadd.f32 %v1783, %v1887
  %v1952 = vadd.f32 %v1784, %v1892
  %v1953 = vadd.f32 %v1785, %v1892
  %v1954 = vadd.f32 %v1786, %v1897
  %v1955 = vadd.f32 %v1787, %v1897
  %v1956 = vadd.f32 %v1788, %v1902
  %v1957 = vadd.f32 %v1789, %v1902
  %v1958 = vadd.f32 %v1790, %v1907
  %v1959 = vadd.f32 %v1791, %v1907
  %v1960 = vadd.f32 %v1792, %v1912
  %v1961 = vadd.f32 %v1793, %v1912
  %v1962 = vmax.f32 %v1914, 0.0
  %v1963 = vmax.f32 %v1915, 0.0
  %v1964 = vmax.f32 %v1916, 0.0
  %v1965 = vmax.f32 %v1917, 0.0
  %v1966 = vmax.f32 %v1918, 0.0
  %v1967 = vmax.f32 %v1919, 0.0
  %v1968 = vmax.f32 %v1920, 0.0
  %v1969 = vmax.f32 %v1921, 0.0
  %v1970 = vmax.f32 %v1922, 0.0
  %v1971 = vmax.f32 %v1923, 0.0
  %v1972 = vmax.f32 %v1924, 0.0
  %v1973 = vmax.f32 %v1925, 0.0
  %v1974 = vmax.f32 %v1926, 0.0
  %v1975 = vmax.f32 %v1927, 0.0
  %v1976 = vmax.f32 %v1928, 0.0
  %v1977 = vmax.f32 %v1929, 0.0
  %v1978 = vmax.f32 %v1930, 0.0
  %v1979 = vmax.f32 %v1931, 0.0
  %v1980 = vmax.f32 %v1932, 0.0
  %v1981 = vmax.f32 %v1933, 0.0
  %v1982 = vmax.f32 %v1934, 0.0
  %v1983 = vmax.f32 %v1935, 0.0
  %v1984 = vmax.f32 %v1936, 0.0
  %v1985 = vmax.f32 %v1937, 0.0
  %v1986 = vmax.f32 %v1938, 0.0
  %v1987 = vmax.f32 %v1939, 0.0
  %v1988 = vmax.f32 %v1940, 0.0
  %v1989 = vmax.f32 %v1941, 0.0
  %v1990 = vmax.f32 %v1942, 0.0
  %v1991 = vmax.f32 %v1943, 0.0
  %v1992 = vmax.f32 %v1944, 0.0
  %v1993 = vmax.f32 %v1945, 0.0
  %v1994 = vmax.f32 %v1946, 0.0
  %v1995 = vmax.f32 %v1947, 0.0
  %v1996 = vmax.f32 %v1948, 0.0
  %v1997 = vmax.f32 %v1949, 0.0
  %v1998 = vmax.f32 %v1950, 0.0
  %v1999 = vmax.f32 %v1951, 0.0
  %v2000 = vmax.f32 %v1952, 0.0
  %v2001 = vmax.f32 %v1953, 0.0
  %v2002 = vmax.f32 %v1954, 0.0
  %v2003 = vmax.f32 %v1955, 0.0
  %v2004 = vmax.f32 %v1956, 0.0
  %v2005 = vmax.f32 %v1957, 0.0
  %v2006 = vmax.f32 %v1958, 0.0
  %v2007 = vmax.f32 %v1959, 0.0
  %v2008 = vmax.f32 %v1960, 0.0
  %v2009 = vmax.f32 %v1961, 0.0
  %2010 = vst [vmem:[%s3] sm:$0xff] %v1962
  %2011 = vst.msk [vmem:[%s3 + $0x8] sm:$0xff] %vm1193, %v1963
  %2012 = vst [vmem:[%s3 + $0x10] sm:$0xff] %v1964
  %2013 = vst.msk [vmem:[%s3 + $0x18] sm:$0xff] %vm1193, %v1965
  %2014 = vst [vmem:[%s3 + $0x20] sm:$0xff] %v1966
  %2015 = vst.msk [vmem:[%s3 + $0x28] sm:$0xff] %vm1193, %v1967
  %2016 = vst [vmem:[%s3 + $0x30] sm:$0xff] %v1968
  %2017 = vst.msk [vmem:[%s3 + $0x38] sm:$0xff] %vm1193, %v1969
  %2018 = vst [vmem:[%s3 + $0x40] sm:$0xff] %v1970
  %2019 = vst.msk [vmem:[%s3 + $0x48] sm:$0xff] %vm1193, %v1971
  %2020 = vst [vmem:[%s3 + $0x50] sm:$0xff] %v1972
  %2021 = vst.msk [vmem:[%s3 + $0x58] sm:$0xff] %vm1193, %v1973
  %2022 = vst [vmem:[%s3 + $0x60] sm:$0xff] %v1974
  %2023 = vst.msk [vmem:[%s3 + $0x68] sm:$0xff] %vm1193, %v1975
  %2024 = vst [vmem:[%s3 + $0x70] sm:$0xff] %v1976
  %2025 = vst.msk [vmem:[%s3 + $0x78] sm:$0xff] %vm1193, %v1977
  %2026 = vst [vmem:[%s3 + $0x80] sm:$0xff] %v1978
  %2027 = vst.msk [vmem:[%s3 + $0x88] sm:$0xff] %vm1193, %v1979
  %2028 = vst [vmem:[%s3 + $0x90] sm:$0xff] %v1980
  %2029 = vst.msk [vmem:[%s3 + $0x98] sm:$0xff] %vm1193, %v1981
  %2030 = vst [vmem:[%s3 + $0xa0] sm:$0xff] %v1982
  %2031 = vst.msk [vmem:[%s3 + $0xa8] sm:$0xff] %vm1193, %v1983
  %2032 = vst [vmem:[%s3 + $0xb0] sm:$0xff] %v1984
  %2033 = vst.msk [vmem:[%s3 + $0xb8] sm:$0xff] %vm1193, %v1985
  %2034 = vst [vmem:[%s3 + $0xc0] sm:$0xff] %v1986
  %2035 = vst.msk [vmem:[%s3 + $0xc8] sm:$0xff] %vm1193, %v1987
  %2036 = vst [vmem:[%s3 + $0xd0] sm:$0xff] %v1988
  %2037 = vst.msk [vmem:[%s3 + $0xd8] sm:$0xff] %vm1193, %v1989
  %2038 = vst [vmem:[%s3 + $0xe0] sm:$0xff] %v1990
  %2039 = vst.msk [vmem:[%s3 + $0xe8] sm:$0xff] %vm1193, %v1991
  %2040 = vst [vmem:[%s3 + $0xf0] sm:$0xff] %v1992
  %2041 = vst.msk [vmem:[%s3 + $0xf8] sm:$0xff] %vm1193, %v1993
  %2042 = vst [vmem:[%s3 + $0x100] sm:$0xff] %v1994
  %2043 = vst.msk [vmem:[%s3 + $0x108] sm:$0xff] %vm1193, %v1995
  %2044 = vst [vmem:[%s3 + $0x110] sm:$0xff] %v1996
  %2045 = vst.msk [vmem:[%s3 + $0x118] sm:$0xff] %vm1193, %v1997
  %2046 = vst [vmem:[%s3 + $0x120] sm:$0xff] %v1998
  %2047 = vst.msk [vmem:[%s3 + $0x128] sm:$0xff] %vm1193, %v1999
  %2048 = vst [vmem:[%s3 + $0x130] sm:$0xff] %v2000
  %2049 = vst.msk [vmem:[%s3 + $0x138] sm:$0xff] %vm1193, %v2001
  %2050 = vst [vmem:[%s3 + $0x140] sm:$0xff] %v2002
  %2051 = vst.msk [vmem:[%s3 + $0x148] sm:$0xff] %vm1193, %v2003
  %2052 = vst [vmem:[%s3 + $0x150] sm:$0xff] %v2004
  %2053 = vst.msk [vmem:[%s3 + $0x158] sm:$0xff] %vm1193, %v2005
  %2054 = vst [vmem:[%s3 + $0x160] sm:$0xff] %v2006
  %2055 = vst.msk [vmem:[%s3 + $0x168] sm:$0xff] %vm1193, %v2007
  %2056 = vst [vmem:[%s3 + $0x170] sm:$0xff] %v2008
  %2057 = vst.msk [vmem:[%s3 + $0x178] sm:$0xff] %vm1193, %v2009
  // Predicated region
  $region14: #{conv_bn_relu.1} parent=0 // pred_check
    _
  $region15: #{conv_bn_relu.1} parent=0 // pred_check_branch
    %2059 = sbr.rel (0) target = $region17
  $region16: #{conv_bn_relu.1} parent=0 // pred_region
    _
  $region17: #{conv_bn_relu.1} parent=0 // pred_fallthru
    _
  // Predicated region
  $region18: #{conv_bn_relu.1} parent=0 // pred_check
    _
  $region19: #{conv_bn_relu.1} parent=0 // pred_check_branch
    %2061 = sbr.rel (0) target = $region21
  $region20: #{conv_bn_relu.1} parent=0 // pred_region
    _
  $region21: #{conv_bn_relu.1} parent=0 // pred_fallthru
    _

</llo_original>
